<compile_context>
chip_gen: v7x
topology: tpu7x:2x2x1
jax: 0.10.0
libtpu: 0.0.40
codegen_flags: <defaults>
</compile_context>

<pallas_src>
import math
import jax
import jax.numpy as jnp
from jax.experimental import pallas as pl
from jax.experimental.pallas import tpu as pltpu

# ---- synthetic CLIP text-tower config (small) ------------------------------
WIDTH = 32            # transformer.width
HEADS = 4
HEAD_DIM = WIDTH // HEADS
LAYERS = 2
SEQ = 8               # context length (n_ctx)
EMBED = 32            # text_projection output dim
MLP_DIM = 4 * WIDTH
LN_EPS = 1e-5
N_PROMPTS = 4
NS = N_PROMPTS * SEQ  # flattened (prompt, token) rows


def _layer_norm(v, g, b):
    mu = jnp.mean(v, axis=-1, keepdims=True)
    var = jnp.mean((v - mu) ** 2, axis=-1, keepdims=True)
    return (v - mu) * jax.lax.rsqrt(var + LN_EPS) * g + b


# ---------------------------------------------------------------------------
# Kernel body: one transformer layer per grid step; activations resident in a
# VMEM scratch; ln_final + EOT gather + text_projection on the last step.
# ---------------------------------------------------------------------------
def _text_encoder_kernel(x0_ref, eot_ref, maskt_ref, hmask_ref,
                         ln1g_ref, ln1b_ref, wqkv_ref, bqkv_ref, wo_ref, bo_ref,
                         ln2g_ref, ln2b_ref, w1_ref, b1_ref, w2_ref, b2_ref,
                         lnfg_ref, lnfb_ref, proj_ref, o_ref, x_sc):
    l = pl.program_id(0)

    @pl.when(l == 0)
    def _():
        x_sc[...] = x0_ref[...]

    x = x_sc[...]                                  # (NS, D) f32, VMEM-resident
    hmask = hmask_ref[...]                         # (HEADS*NS, D) head-lane selector

    # ----- attention branch: x = x + attn(ln_1(x)) -----
    h = _layer_norm(x, ln1g_ref[0], ln1b_ref[0])
    qkv = jnp.dot(h.astype(jnp.bfloat16), wqkv_ref[0],
                  preferred_element_type=jnp.float32) + bqkv_ref[0]   # (NS, 3D)
    q = qkv[:, :WIDTH]                             # scale pre-folded into w_qkv/b_qkv
    k = qkv[:, WIDTH:2 * WIDTH].astype(jnp.bfloat16)
    v = qkv[:, 2 * WIDTH:].astype(jnp.bfloat16)

    # All heads' scores in ONE matmul: row h*NS+i holds head h / query i.
    q_tall = (jnp.tile(q, (HEADS, 1)) * hmask).astype(jnp.bfloat16)   # (H*NS, D)
    s = jax.lax.dot_general(q_tall, k, (((1,), (1,)), ((), ())),
                            preferred_element_type=jnp.float32)       # (H*NS, NS)
    s = s + maskt_ref[...]                          # block-diag causal mask (tiled)

    # Exact per-(head, query)-row softmax (f32), approx reciprocal on the EUP.
    m = jnp.max(s, axis=-1, keepdims=True)
    e = jnp.exp(s - m)
    p = e * pl.reciprocal(jnp.sum(e, axis=-1, keepdims=True), approx=True)

    # All heads' P@V in ONE matmul, then head-lane mask + fold to (NS, D).
    o_all = jnp.dot(p.astype(jnp.bfloat16), v,
                    preferred_element_type=jnp.float32) * hmask        # (H*NS, D)
    o_cat = o_all[0:NS]
    for hd in range(1, HEADS):
        o_cat = o_cat + o_all[hd * NS:(hd + 1) * NS]                   # (NS, D)

    attn = jnp.dot(o_cat.astype(jnp.bfloat16), wo_ref[0],
                   preferred_element_type=jnp.float32) + bo_ref[0]     # one W_o matmul
    x = x + attn

    # ----- MLP branch: x = x + mlp(ln_2(x)), QuickGELU -----
    h2 = _layer_norm(x, ln2g_ref[0], ln2b_ref[0])
    h2 = jnp.dot(h2.astype(jnp.bfloat16), w1_ref[0],
                 preferred_element_type=jnp.float32) + b1_ref[0]
    h2 = h2 * jax.nn.sigmoid(1.702 * h2)
    h2 = jnp.dot(h2.astype(jnp.bfloat16), w2_ref[0],
                 preferred_element_type=jnp.float32) + b2_ref[0]
    x = x + h2

    x_sc[...] = x

    # ----- last layer: EOT gather (bf16 one-hot matmul) + ln_final + proj -----
    @pl.when(l == pl.num_programs(0) - 1)
    def _():
        col = jax.lax.broadcasted_iota(jnp.int32, (N_PROMPTS, NS), 1)
        base = jax.lax.broadcasted_iota(jnp.int32, (N_PROMPTS, 1), 0) * SEQ
        onehot = (col == (eot_ref[...] + base)).astype(jnp.bfloat16)    # exact in bf16
        rows = jnp.dot(onehot, x.astype(jnp.bfloat16),
                       preferred_element_type=jnp.float32)              # (N, D)
        rows = _layer_norm(rows, lnfg_ref[...], lnfb_ref[...])
        out = jnp.dot(rows.astype(jnp.bfloat16), proj_ref[...],
                      preferred_element_type=jnp.float32)               # (N, E)
        o_ref[...] = out.astype(o_ref.dtype)


# ---------------------------------------------------------------------------
# Full TextEncoder.forward
# ---------------------------------------------------------------------------
def text_encoder_forward(prompts, tokenized_prompts, packed):
    N, S, D = prompts.shape
    # glue: positional-embedding add + flatten, and token-id argmax
    x0 = (prompts + packed["pos_emb"][None]).reshape(N * S, D)
    eot = jnp.argmax(tokenized_prompts, axis=-1).astype(jnp.int32).reshape(N, 1)

    def full2(shape):
        return pl.BlockSpec(shape, lambda l: (0, 0))

    def per_layer(shape):
        return pl.BlockSpec((1,) + shape, lambda l: (l, 0, 0))

    grid_spec = pltpu.PrefetchScalarGridSpec(
        num_scalar_prefetch=0,
        grid=(LAYERS,),
        in_specs=[
            full2((NS, WIDTH)),               # x0
            full2((N, 1)),                    # eot indices
            full2((HEADS * NS, NS)),          # tiled block-diag causal mask
            full2((HEADS * NS, WIDTH)),       # head-lane selection mask
            per_layer((1, WIDTH)),            # ln1_g
            per_layer((1, WIDTH)),            # ln1_b
            per_layer((WIDTH, 3 * WIDTH)),    # w_qkv (bf16, Q pre-scaled)
            per_layer((1, 3 * WIDTH)),        # b_qkv (Q pre-scaled)
            per_layer((WIDTH, WIDTH)),        # w_o (bf16)
            per_layer((1, WIDTH)),            # b_o
            per_layer((1, WIDTH)),            # ln2_g
            per_layer((1, WIDTH)),            # ln2_b
            per_layer((WIDTH, MLP_DIM)),      # w_1 (bf16)
            per_layer((1, MLP_DIM)),          # b_1
            per_layer((MLP_DIM, WIDTH)),      # w_2 (bf16)
            per_layer((1, WIDTH)),            # b_2
            full2((1, WIDTH)),                # ln_f_g
            full2((1, WIDTH)),                # ln_f_b
            full2((WIDTH, EMBED)),            # text_projection (bf16)
        ],
        out_specs=pl.BlockSpec((N, EMBED), lambda l: (0, 0)),
        scratch_shapes=[pltpu.VMEM((NS, WIDTH), jnp.float32)],
    )

    return pl.pallas_call(
        _text_encoder_kernel,
        out_shape=jax.ShapeDtypeStruct((N, EMBED), jnp.float32),
        grid_spec=grid_spec,
        compiler_params=pltpu.CompilerParams(
            # layer axis is sequential (activations carried in scratch)
            dimension_semantics=("arbitrary",),
            # headroom for real CLIP widths / v7x's 64 MiB VMEM; irrelevant at toy size
            vmem_limit_bytes=64 * 1024 * 1024,
        ),
    )(x0, eot, packed["mask_tall"], packed["hmask"],
      packed["ln1_g"], packed["ln1_b"], packed["w_qkv"], packed["b_qkv"],
      packed["w_o"], packed["b_o"], packed["ln2_g"], packed["ln2_b"],
      packed["w_1"], packed["b_1"], packed["w_2"], packed["b_2"],
      packed["ln_f_g"], packed["ln_f_b"], packed["text_proj"])


# ---------------------------------------------------------------------------
# Deterministic synthetic parameters (f32 "PyTorch" weights) and the packed /
# stacked kernel-side copies (bf16 matmul weights, folded scale, masks).
# ---------------------------------------------------------------------------
def init_params(key):
    def nrm(k, shape, scale):
        return (scale * jax.random.normal(k, shape)).astype(jnp.float32)

    keys = iter(jax.random.split(key, 8 * LAYERS + 4))
    layers = []
    for _ in range(LAYERS):
        layers.append(dict(
            ln1_g=jnp.ones((1, WIDTH), jnp.float32),
            ln1_b=jnp.zeros((1, WIDTH), jnp.float32),
            w_qkv=nrm(next(keys), (WIDTH, 3 * WIDTH), 0.05),
            b_qkv=nrm(next(keys), (1, 3 * WIDTH), 0.01),
            w_o=nrm(next(keys), (WIDTH, WIDTH), 0.05),
            b_o=nrm(next(keys), (1, WIDTH), 0.01),
            ln2_g=jnp.ones((1, WIDTH), jnp.float32),
            ln2_b=jnp.zeros((1, WIDTH), jnp.float32),
            w_1=nrm(next(keys), (WIDTH, MLP_DIM), 0.05),
            b_1=nrm(next(keys), (1, MLP_DIM), 0.01),
            w_2=nrm(next(keys), (MLP_DIM, WIDTH), 0.05),
            b_2=nrm(next(keys), (1, WIDTH), 0.01),
        ))
    return dict(
        layers=layers,
        pos_emb=nrm(next(keys), (SEQ, WIDTH), 0.02),
        ln_f_g=jnp.ones((1, WIDTH), jnp.float32),
        ln_f_b=jnp.zeros((1, WIDTH), jnp.float32),
        text_proj=nrm(next(keys), (WIDTH, EMBED), WIDTH ** -0.5),
    )


def pack_params(params):
    L = params["layers"]
    stk = lambda name: jnp.stack([lp[name] for lp in L])
    scale = 1.0 / math.sqrt(HEAD_DIM)

    # fold 1/sqrt(head_dim) into the Q third of w_qkv AND b_qkv (review item 1)
    qcols = jnp.concatenate([jnp.full((WIDTH,), scale, jnp.float32),
                             jnp.ones((2 * WIDTH,), jnp.float32)])
    w_qkv = stk("w_qkv") * qcols[None, None, :]
    b_qkv = stk("b_qkv") * qcols[None, None, :]

    # block-diagonal causal mask over flattened (prompt, token) rows, tiled over
    # heads along sublanes -> (HEADS*NS, NS); built once on the host.
    r = jnp.arange(NS)[:, None]
    c = jnp.arange(NS)[None, :]
    mask = jnp.where((c <= r) & ((r // SEQ) == (c // SEQ)),
                     0.0, -1e9).astype(jnp.float32)
    mask_tall = jnp.tile(mask, (HEADS, 1))

    # head-lane selection: row block h keeps lanes [h*HEAD_DIM, (h+1)*HEAD_DIM)
    hrow = jnp.arange(HEADS * NS)[:, None] // NS
    lane = jnp.arange(WIDTH)[None, :] // HEAD_DIM
    hmask = (hrow == lane).astype(jnp.float32)

    return dict(
        mask_tall=mask_tall,
        hmask=hmask,
        pos_emb=params["pos_emb"],
        ln1_g=stk("ln1_g"), ln1_b=stk("ln1_b"),
        w_qkv=w_qkv.astype(jnp.bfloat16), b_qkv=b_qkv,
        w_o=stk("w_o").astype(jnp.bfloat16), b_o=stk("b_o"),
        ln2_g=stk("ln2_g"), ln2_b=stk("ln2_b"),
        w_1=stk("w_1").astype(jnp.bfloat16), b_1=stk("b_1"),
        w_2=stk("w_2").astype(jnp.bfloat16), b_2=stk("b_2"),
        ln_f_g=params["ln_f_g"], ln_f_b=params["ln_f_b"],
        text_proj=params["text_proj"].astype(jnp.bfloat16),
    )


# ---------------------------------------------------------------------------
# Plain-JAX f32 reference (mirrors the PyTorch forward) for correctness check
# ---------------------------------------------------------------------------
def reference_forward(prompts, tokenized_prompts, params):
    x = prompts + params["pos_emb"][None]
    N, S, D = x.shape
    ri = jnp.arange(S)[:, None]
    ci = jnp.arange(S)[None, :]
    causal = jnp.where(ci <= ri, 0.0, -1e9)
    for L in params["layers"]:
        h = _layer_norm(x, L["ln1_g"][0], L["ln1_b"][0])
        qkv = h @ L["w_qkv"] + L["b_qkv"][0]
        q, k, v = jnp.split(qkv, 3, axis=-1)
        sh = lambda t: t.reshape(N, S, HEADS, HEAD_DIM).transpose(0, 2, 1, 3)
        qh, kh, vh = sh(q), sh(k), sh(v)
        s = jnp.einsum("nhqd,nhkd->nhqk", qh, kh) / math.sqrt(HEAD_DIM) + causal
        p = jax.nn.softmax(s, axis=-1)
        o = jnp.einsum("nhqk,nhkd->nhqd", p, vh).transpose(0, 2, 1, 3).reshape(N, S, D)
        x = x + o @ L["w_o"] + L["b_o"][0]
        h2 = _layer_norm(x, L["ln2_g"][0], L["ln2_b"][0])
        h2 = h2 @ L["w_1"] + L["b_1"][0]
        h2 = h2 * jax.nn.sigmoid(1.702 * h2)
        x = x + h2 @ L["w_2"] + L["b_2"][0]
    x = _layer_norm(x, params["ln_f_g"][0], params["ln_f_b"][0])
    eot = jnp.argmax(tokenized_prompts, axis=-1)
    return x[jnp.arange(N), eot] @ params["text_proj"]


if __name__ == "__main__":
    key = jax.random.PRNGKey(0)
    kp, kx, kt = jax.random.split(key, 3)
    params = init_params(kp)
    packed = pack_params(params)

    # prompts: learned context embeddings already in token-embedding space
    prompts = jax.random.normal(kx, (N_PROMPTS, SEQ, WIDTH), jnp.float32) * 0.1
    # tokenized_prompts: token ids; EOT (largest id) at varying positions
    toks = jax.random.randint(kt, (N_PROMPTS, SEQ), 1, 1000).astype(jnp.int32)
    eot_positions = jnp.array([5, 3, 7, 2], jnp.int32)
    toks = toks.at[jnp.arange(N_PROMPTS), eot_positions].set(49407)

    fwd = jax.jit(text_encoder_forward)
    out = jax.block_until_ready(fwd(prompts, toks, packed))

    ref = reference_forward(prompts, toks, params)
    assert out.shape == (N_PROMPTS, EMBED), out.shape
    max_err = float(jnp.max(jnp.abs(out - ref)))
    # bf16 matmul operands (f32 accumulate), approx reciprocal in softmax and the
    # bf16 EOT gather force a loose-but-meaningful tolerance vs the f32 reference.
    assert jnp.allclose(out, ref, atol=3e-2, rtol=3e-2), max_err
    print("KERNEL_OK")
</pallas_src>

<mosaic_0001>
module attributes {stable_mosaic.version = 11 : i64} {
  func.func @_text_encoder_kernel(%arg0: i32, %arg1: memref<32x32xf32, #tpu.memory_space<vmem>>, %arg2: memref<4x1xi32, #tpu.memory_space<vmem>>, %arg3: memref<128x32xf32, #tpu.memory_space<vmem>>, %arg4: memref<128x32xf32, #tpu.memory_space<vmem>>, %arg5: memref<1x1x32xf32, #tpu.memory_space<vmem>>, %arg6: memref<1x1x32xf32, #tpu.memory_space<vmem>>, %arg7: memref<1x32x96xbf16, #tpu.memory_space<vmem>>, %arg8: memref<1x1x96xf32, #tpu.memory_space<vmem>>, %arg9: memref<1x32x32xbf16, #tpu.memory_space<vmem>>, %arg10: memref<1x1x32xf32, #tpu.memory_space<vmem>>, %arg11: memref<1x1x32xf32, #tpu.memory_space<vmem>>, %arg12: memref<1x1x32xf32, #tpu.memory_space<vmem>>, %arg13: memref<1x32x128xbf16, #tpu.memory_space<vmem>>, %arg14: memref<1x1x128xf32, #tpu.memory_space<vmem>>, %arg15: memref<1x128x32xbf16, #tpu.memory_space<vmem>>, %arg16: memref<1x1x32xf32, #tpu.memory_space<vmem>>, %arg17: memref<1x32xf32, #tpu.memory_space<vmem>>, %arg18: memref<1x32xf32, #tpu.memory_space<vmem>>, %arg19: memref<32x32xbf16, #tpu.memory_space<vmem>>, %arg20: memref<4x32xf32, #tpu.memory_space<vmem>>, %arg21: memref<32x32xf32, #tpu.memory_space<vmem>>) attributes {dimension_semantics = [#tpu.dimension_semantics<arbitrary>], iteration_bounds = array<i64: 2>, scalar_prefetch = 0 : i64, scratch_operands = 1 : i64, tpu.core_type = #tpu.core_type<tc>, window_params = [{pipeline_mode = #tpu.pipeline_mode<synchronous>, transform_indices = @transform_0, window_bounds = array<i64: 32, 32>}, {pipeline_mode = #tpu.pipeline_mode<synchronous>, transform_indices = @transform_1, window_bounds = array<i64: 4, 1>}, {pipeline_mode = #tpu.pipeline_mode<synchronous>, transform_indices = @transform_2, window_bounds = array<i64: 128, 32>}, {pipeline_mode = #tpu.pipeline_mode<synchronous>, transform_indices = @transform_3, window_bounds = array<i64: 128, 32>}, {transform_indices = @transform_4, window_bounds = array<i64: 1, 1, 32>}, {transform_indices = @transform_5, window_bounds = array<i64: 1, 1, 32>}, {transform_indices = @transform_6, window_bounds = array<i64: 1, 32, 96>}, {transform_indices = @transform_7, window_bounds = array<i64: 1, 1, 96>}, {transform_indices = @transform_8, window_bounds = array<i64: 1, 32, 32>}, {transform_indices = @transform_9, window_bounds = array<i64: 1, 1, 32>}, {transform_indices = @transform_10, window_bounds = array<i64: 1, 1, 32>}, {transform_indices = @transform_11, window_bounds = array<i64: 1, 1, 32>}, {transform_indices = @transform_12, window_bounds = array<i64: 1, 32, 128>}, {transform_indices = @transform_13, window_bounds = array<i64: 1, 1, 128>}, {transform_indices = @transform_14, window_bounds = array<i64: 1, 128, 32>}, {transform_indices = @transform_15, window_bounds = array<i64: 1, 1, 32>}, {pipeline_mode = #tpu.pipeline_mode<synchronous>, transform_indices = @transform_16, window_bounds = array<i64: 1, 32>}, {pipeline_mode = #tpu.pipeline_mode<synchronous>, transform_indices = @transform_17, window_bounds = array<i64: 1, 32>}, {pipeline_mode = #tpu.pipeline_mode<synchronous>, transform_indices = @transform_18, window_bounds = array<i64: 32, 32>}, {pipeline_mode = #tpu.pipeline_mode<synchronous>, transform_indices = @transform_19, window_bounds = array<i64: 4, 32>}]} {
    %c0_i32 = arith.constant 0 : i32
    %0 = arith.cmpi eq, %arg0, %c0_i32 : i32
    %1 = arith.extui %0 : i1 to i32
    %c0_i32_0 = arith.constant 0 : i32
    %2 = arith.cmpi ne, %1, %c0_i32_0 : i32
    scf.if %2 {
      %c0_64 = arith.constant 0 : index
      %c0_65 = arith.constant 0 : index
      %134 = vector.load %arg1[%c0_64, %c0_65] : memref<32x32xf32, #tpu.memory_space<vmem>>, vector<32x32xf32>
      %c0_66 = arith.constant 0 : index
      %c0_67 = arith.constant 0 : index
      %135 = vector.load %arg21[%c0_66, %c0_67] : memref<32x32xf32, #tpu.memory_space<vmem>>, vector<32x32xf32>
      tpu.vector_store %arg21[%c0_66, %c0_67], %134 {strides = array<i32>} : memref<32x32xf32, #tpu.memory_space<vmem>>, vector<32x32xf32>,
    } else {
    }
    %c0 = arith.constant 0 : index
    %c0_1 = arith.constant 0 : index
    %3 = vector.load %arg21[%c0, %c0_1] : memref<32x32xf32, #tpu.memory_space<vmem>>, vector<32x32xf32>
    %c0_2 = arith.constant 0 : index
    %c0_3 = arith.constant 0 : index
    %4 = vector.load %arg4[%c0_2, %c0_3] : memref<128x32xf32, #tpu.memory_space<vmem>>, vector<128x32xf32>
    %c0_4 = arith.constant 0 : index
    %c0_5 = arith.constant 0 : index
    %c0_6 = arith.constant 0 : index
    %5 = vector.load %arg5[%c0_4, %c0_5, %c0_6] : memref<1x1x32xf32, #tpu.memory_space<vmem>>, vector<1x1x32xf32>
    %6 = vector.shape_cast %5 : vector<1x1x32xf32> to vector<1x32xf32>
    %c0_7 = arith.constant 0 : index
    %c0_8 = arith.constant 0 : index
    %c0_9 = arith.constant 0 : index
    %7 = vector.load %arg6[%c0_7, %c0_8, %c0_9] : memref<1x1x32xf32, #tpu.memory_space<vmem>>, vector<1x1x32xf32>
    %8 = vector.shape_cast %7 : vector<1x1x32xf32> to vector<1x32xf32>
    %cst = arith.constant dense<0.000000e+00> : vector<32xf32>
    %9 = vector.multi_reduction <add>, %3, %cst [1] : vector<32x32xf32> to vector<32xf32>
    %10 = vector.shape_cast %9 : vector<32xf32> to vector<32x1xf32>
    %cst_10 = arith.constant 3.200000e+01 : f32
    %11 = vector.broadcast %cst_10 : f32 to vector<32x1xf32>
    %12 = arith.divf %10, %11 : vector<32x1xf32>
    %13 = vector.broadcast %12 : vector<32x1xf32> to vector<32x32xf32>
    %14 = arith.subf %3, %13 : vector<32x32xf32>
    %15 = arith.mulf %14, %14 : vector<32x32xf32>
    %cst_11 = arith.constant dense<0.000000e+00> : vector<32xf32>
    %16 = vector.multi_reduction <add>, %15, %cst_11 [1] : vector<32x32xf32> to vector<32xf32>
    %17 = vector.shape_cast %16 : vector<32xf32> to vector<32x1xf32>
    %cst_12 = arith.constant 3.200000e+01 : f32
    %18 = vector.broadcast %cst_12 : f32 to vector<32x1xf32>
    %19 = arith.divf %17, %18 : vector<32x1xf32>
    %20 = vector.broadcast %12 : vector<32x1xf32> to vector<32x32xf32>
    %21 = arith.subf %3, %20 : vector<32x32xf32>
    %cst_13 = arith.constant 9.99999974E-6 : f32
    %22 = vector.broadcast %cst_13 : f32 to vector<32x1xf32>
    %23 = arith.addf %19, %22 : vector<32x1xf32>
    %24 = math.rsqrt %23 : vector<32x1xf32>
    %25 = vector.broadcast %24 : vector<32x1xf32> to vector<32x32xf32>
    %26 = arith.mulf %21, %25 : vector<32x32xf32>
    %27 = vector.broadcast %6 : vector<1x32xf32> to vector<32x32xf32>
    %28 = arith.mulf %26, %27 : vector<32x32xf32>
    %29 = vector.broadcast %8 : vector<1x32xf32> to vector<32x32xf32>
    %30 = arith.addf %28, %29 : vector<32x32xf32>
    %31 = arith.truncf %30 : vector<32x32xf32> to vector<32x32xbf16>
    %c0_14 = arith.constant 0 : index
    %c0_15 = arith.constant 0 : index
    %c0_16 = arith.constant 0 : index
    %32 = vector.load %arg7[%c0_14, %c0_15, %c0_16] : memref<1x32x96xbf16, #tpu.memory_space<vmem>>, vector<1x32x96xbf16>
    %33 = vector.shape_cast %32 : vector<1x32x96xbf16> to vector<32x96xbf16>
    %cst_17 = arith.constant dense<0.000000e+00> : vector<32x96xf32>
    %34 = tpu.matmul %31, %33, %cst_17 {dimension_numbers = #tpu.dot_dimension_numbers<[1], [0], [0], [1], [0, 0, 1, 1], [], []>} : vector<32x32xbf16>, vector<32x96xbf16>, vector<32x96xf32> -> vector<32x96xf32>
    %c0_18 = arith.constant 0 : index
    %c0_19 = arith.constant 0 : index
    %c0_20 = arith.constant 0 : index
    %35 = vector.load %arg8[%c0_18, %c0_19, %c0_20] : memref<1x1x96xf32, #tpu.memory_space<vmem>>, vector<1x1x96xf32>
    %36 = vector.shape_cast %35 : vector<1x1x96xf32> to vector<1x96xf32>
    %37 = vector.broadcast %36 : vector<1x96xf32> to vector<32x96xf32>
    %38 = arith.addf %34, %37 : vector<32x96xf32>
    %39 = vector.extract_strided_slice %38 {offsets = [0, 0], sizes = [32, 32], strides = [1, 1]} : vector<32x96xf32> to vector<32x32xf32>
    %40 = vector.extract_strided_slice %38 {offsets = [0, 32], sizes = [32, 32], strides = [1, 1]} : vector<32x96xf32> to vector<32x32xf32>
    %41 = arith.truncf %40 : vector<32x32xf32> to vector<32x32xbf16>
    %42 = vector.extract_strided_slice %38 {offsets = [0, 64], sizes = [32, 32], strides = [1, 1]} : vector<32x96xf32> to vector<32x32xf32>
    %43 = arith.truncf %42 : vector<32x32xf32> to vector<32x32xbf16>
    %44 = tpu.concatenate %39, %39, %39, %39 in 0 : vector<32x32xf32>, vector<32x32xf32>, vector<32x32xf32>, vector<32x32xf32> -> vector<128x32xf32>
    %45 = arith.mulf %44, %4 : vector<128x32xf32>
    %46 = arith.truncf %45 : vector<128x32xf32> to vector<128x32xbf16>
    %cst_21 = arith.constant dense<0.000000e+00> : vector<128x32xf32>
    %47 = tpu.matmul %46, %41, %cst_21 {dimension_numbers = #tpu.dot_dimension_numbers<[1], [1], [0], [0], [0, 0, 1, 0], [], []>} : vector<128x32xbf16>, vector<32x32xbf16>, vector<128x32xf32> -> vector<128x32xf32>
    %c0_22 = arith.constant 0 : index
    %c0_23 = arith.constant 0 : index
    %48 = vector.load %arg3[%c0_22, %c0_23] : memref<128x32xf32, #tpu.memory_space<vmem>>, vector<128x32xf32>
    %49 = arith.addf %47, %48 : vector<128x32xf32>
    %cst_24 = arith.constant dense<0xFF800000> : vector<128xf32>
    %50 = vector.multi_reduction <maximumf>, %49, %cst_24 [1] : vector<128x32xf32> to vector<128xf32>
    %51 = vector.shape_cast %50 : vector<128xf32> to vector<128x1xf32>
    %52 = vector.broadcast %51 : vector<128x1xf32> to vector<128x32xf32>
    %53 = arith.subf %49, %52 : vector<128x32xf32>
    %54 = math.exp %53 : vector<128x32xf32>
    %cst_25 = arith.constant dense<0.000000e+00> : vector<128xf32>
    %55 = vector.multi_reduction <add>, %54, %cst_25 [1] : vector<128x32xf32> to vector<128xf32>
    %56 = vector.shape_cast %55 : vector<128xf32> to vector<128x1xf32>
    %57 = tpu.reciprocal %56 {approx = true} : vector<128x1xf32> -> vector<128x1xf32>
    %58 = vector.broadcast %57 : vector<128x1xf32> to vector<128x32xf32>
    %59 = arith.mulf %54, %58 : vector<128x32xf32>
    %60 = arith.truncf %59 : vector<128x32xf32> to vector<128x32xbf16>
    %cst_26 = arith.constant dense<0.000000e+00> : vector<128x32xf32>
    %61 = tpu.matmul %60, %43, %cst_26 {dimension_numbers = #tpu.dot_dimension_numbers<[1], [0], [0], [1], [0, 0, 1, 1], [], []>} : vector<128x32xbf16>, vector<32x32xbf16>, vector<128x32xf32> -> vector<128x32xf32>
    %62 = arith.mulf %61, %4 : vector<128x32xf32>
    %63 = vector.extract_strided_slice %62 {offsets = [0, 0], sizes = [32, 32], strides = [1, 1]} : vector<128x32xf32> to vector<32x32xf32>
    %64 = vector.extract_strided_slice %62 {offsets = [32, 0], sizes = [32, 32], strides = [1, 1]} : vector<128x32xf32> to vector<32x32xf32>
    %65 = arith.addf %63, %64 : vector<32x32xf32>
    %66 = vector.extract_strided_slice %62 {offsets = [64, 0], sizes = [32, 32], strides = [1, 1]} : vector<128x32xf32> to vector<32x32xf32>
    %67 = arith.addf %65, %66 : vector<32x32xf32>
    %68 = vector.extract_strided_slice %62 {offsets = [96, 0], sizes = [32, 32], strides = [1, 1]} : vector<128x32xf32> to vector<32x32xf32>
    %69 = arith.addf %67, %68 : vector<32x32xf32>
    %70 = arith.truncf %69 : vector<32x32xf32> to vector<32x32xbf16>
    %c0_27 = arith.constant 0 : index
    %c0_28 = arith.constant 0 : index
    %c0_29 = arith.constant 0 : index
    %71 = vector.load %arg9[%c0_27, %c0_28, %c0_29] : memref<1x32x32xbf16, #tpu.memory_space<vmem>>, vector<1x32x32xbf16>
    %72 = vector.shape_cast %71 : vector<1x32x32xbf16> to vector<32x32xbf16>
    %cst_30 = arith.constant dense<0.000000e+00> : vector<32x32xf32>
    %73 = tpu.matmul %70, %72, %cst_30 {dimension_numbers = #tpu.dot_dimension_numbers<[1], [0], [0], [1], [0, 0, 1, 1], [], []>} : vector<32x32xbf16>, vector<32x32xbf16>, vector<32x32xf32> -> vector<32x32xf32>
    %c0_31 = arith.constant 0 : index
    %c0_32 = arith.constant 0 : index
    %c0_33 = arith.constant 0 : index
    %74 = vector.load %arg10[%c0_31, %c0_32, %c0_33] : memref<1x1x32xf32, #tpu.memory_space<vmem>>, vector<1x1x32xf32>
    %75 = vector.shape_cast %74 : vector<1x1x32xf32> to vector<1x32xf32>
    %76 = vector.broadcast %75 : vector<1x32xf32> to vector<32x32xf32>
    %77 = arith.addf %73, %76 : vector<32x32xf32>
    %78 = arith.addf %3, %77 : vector<32x32xf32>
    %c0_34 = arith.constant 0 : index
    %c0_35 = arith.constant 0 : index
    %c0_36 = arith.constant 0 : index
    %79 = vector.load %arg11[%c0_34, %c0_35, %c0_36] : memref<1x1x32xf32, #tpu.memory_space<vmem>>, vector<1x1x32xf32>
    %80 = vector.shape_cast %79 : vector<1x1x32xf32> to vector<1x32xf32>
    %c0_37 = arith.constant 0 : index
    %c0_38 = arith.constant 0 : index
    %c0_39 = arith.constant 0 : index
    %81 = vector.load %arg12[%c0_37, %c0_38, %c0_39] : memref<1x1x32xf32, #tpu.memory_space<vmem>>, vector<1x1x32xf32>
    %82 = vector.shape_cast %81 : vector<1x1x32xf32> to vector<1x32xf32>
    %cst_40 = arith.constant dense<0.000000e+00> : vector<32xf32>
    %83 = vector.multi_reduction <add>, %78, %cst_40 [1] : vector<32x32xf32> to vector<32xf32>
    %84 = vector.shape_cast %83 : vector<32xf32> to vector<32x1xf32>
    %cst_41 = arith.constant 3.200000e+01 : f32
    %85 = vector.broadcast %cst_41 : f32 to vector<32x1xf32>
    %86 = arith.divf %84, %85 : vector<32x1xf32>
    %87 = vector.broadcast %86 : vector<32x1xf32> to vector<32x32xf32>
    %88 = arith.subf %78, %87 : vector<32x32xf32>
    %89 = arith.mulf %88, %88 : vector<32x32xf32>
    %cst_42 = arith.constant dense<0.000000e+00> : vector<32xf32>
    %90 = vector.multi_reduction <add>, %89, %cst_42 [1] : vector<32x32xf32> to vector<32xf32>
    %91 = vector.shape_cast %90 : vector<32xf32> to vector<32x1xf32>
    %cst_43 = arith.constant 3.200000e+01 : f32
    %92 = vector.broadcast %cst_43 : f32 to vector<32x1xf32>
    %93 = arith.divf %91, %92 : vector<32x1xf32>
    %94 = vector.broadcast %86 : vector<32x1xf32> to vector<32x32xf32>
    %95 = arith.subf %78, %94 : vector<32x32xf32>
    %cst_44 = arith.constant 9.99999974E-6 : f32
    %96 = vector.broadcast %cst_44 : f32 to vector<32x1xf32>
    %97 = arith.addf %93, %96 : vector<32x1xf32>
    %98 = math.rsqrt %97 : vector<32x1xf32>
    %99 = vector.broadcast %98 : vector<32x1xf32> to vector<32x32xf32>
    %100 = arith.mulf %95, %99 : vector<32x32xf32>
    %101 = vector.broadcast %80 : vector<1x32xf32> to vector<32x32xf32>
    %102 = arith.mulf %100, %101 : vector<32x32xf32>
    %103 = vector.broadcast %82 : vector<1x32xf32> to vector<32x32xf32>
    %104 = arith.addf %102, %103 : vector<32x32xf32>
    %105 = arith.truncf %104 : vector<32x32xf32> to vector<32x32xbf16>
    %c0_45 = arith.constant 0 : index
    %c0_46 = arith.constant 0 : index
    %c0_47 = arith.constant 0 : index
    %106 = vector.load %arg13[%c0_45, %c0_46, %c0_47] : memref<1x32x128xbf16, #tpu.memory_space<vmem>>, vector<1x32x128xbf16>
    %107 = vector.shape_cast %106 : vector<1x32x128xbf16> to vector<32x128xbf16>
    %cst_48 = arith.constant dense<0.000000e+00> : vector<32x128xf32>
    %108 = tpu.matmul %105, %107, %cst_48 {dimension_numbers = #tpu.dot_dimension_numbers<[1], [0], [0], [1], [0, 0, 1, 1], [], []>} : vector<32x32xbf16>, vector<32x128xbf16>, vector<32x128xf32> -> vector<32x128xf32>
    %c0_49 = arith.constant 0 : index
    %c0_50 = arith.constant 0 : index
    %c0_51 = arith.constant 0 : index
    %109 = vector.load %arg14[%c0_49, %c0_50, %c0_51] : memref<1x1x128xf32, #tpu.memory_space<vmem>>, vector<1x1x128xf32>
    %110 = vector.shape_cast %109 : vector<1x1x128xf32> to vector<1x128xf32>
    %111 = vector.broadcast %110 : vector<1x128xf32> to vector<32x128xf32>
    %112 = arith.addf %108, %111 : vector<32x128xf32>
    %cst_52 = arith.constant 1.702000e+00 : f32
    %113 = vector.broadcast %cst_52 : f32 to vector<32x128xf32>
    %114 = arith.mulf %113, %112 : vector<32x128xf32>
    %115 = arith.negf %114 : vector<32x128xf32>
    %116 = math.exp %115 : vector<32x128xf32>
    %cst_53 = arith.constant 1.000000e+00 : f32
    %117 = vector.broadcast %cst_53 : f32 to vector<32x128xf32>
    %118 = arith.addf %117, %116 : vector<32x128xf32>
    %119 = arith.divf %117, %118 : vector<32x128xf32>
    %120 = arith.mulf %112, %119 : vector<32x128xf32>
    %121 = arith.truncf %120 : vector<32x128xf32> to vector<32x128xbf16>
    %c0_54 = arith.constant 0 : index
    %c0_55 = arith.constant 0 : index
    %c0_56 = arith.constant 0 : index
    %122 = vector.load %arg15[%c0_54, %c0_55, %c0_56] : memref<1x128x32xbf16, #tpu.memory_space<vmem>>, vector<1x128x32xbf16>
    %123 = vector.shape_cast %122 : vector<1x128x32xbf16> to vector<128x32xbf16>
    %cst_57 = arith.constant dense<0.000000e+00> : vector<32x32xf32>
    %124 = tpu.matmul %121, %123, %cst_57 {dimension_numbers = #tpu.dot_dimension_numbers<[1], [0], [0], [1], [0, 0, 1, 1], [], []>} : vector<32x128xbf16>, vector<128x32xbf16>, vector<32x32xf32> -> vector<32x32xf32>
    %c0_58 = arith.constant 0 : index
    %c0_59 = arith.constant 0 : index
    %c0_60 = arith.constant 0 : index
    %125 = vector.load %arg16[%c0_58, %c0_59, %c0_60] : memref<1x1x32xf32, #tpu.memory_space<vmem>>, vector<1x1x32xf32>
    %126 = vector.shape_cast %125 : vector<1x1x32xf32> to vector<1x32xf32>
    %127 = vector.broadcast %126 : vector<1x32xf32> to vector<32x32xf32>
    %128 = arith.addf %124, %127 : vector<32x32xf32>
    %129 = arith.addf %78, %128 : vector<32x32xf32>
    %c0_61 = arith.constant 0 : index
    %c0_62 = arith.constant 0 : index
    %130 = vector.load %arg21[%c0_61, %c0_62] : memref<32x32xf32, #tpu.memory_space<vmem>>, vector<32x32xf32>
    tpu.vector_store %arg21[%c0_61, %c0_62], %129 {strides = array<i32>} : memref<32x32xf32, #tpu.memory_space<vmem>>, vector<32x32xf32>,
    %c1_i32 = arith.constant 1 : i32
    %131 = arith.cmpi eq, %arg0, %c1_i32 : i32
    %132 = arith.extui %131 : i1 to i32
    %c0_i32_63 = arith.constant 0 : i32
    %133 = arith.cmpi ne, %132, %c0_i32_63 : i32
    scf.if %133 {
      %134 = tpu.iota {dimensions = array<i32: 1>} : vector<4x32xi32>
      %135 = tpu.iota {dimensions = array<i32: 0>} : vector<4x1xi32>
      %c8_i32 = arith.constant 8 : i32
      %136 = vector.broadcast %c8_i32 : i32 to vector<4x1xi32>
      %137 = arith.muli %135, %136 : vector<4x1xi32>
      %c0_64 = arith.constant 0 : index
      %c0_65 = arith.constant 0 : index
      %138 = vector.load %arg2[%c0_64, %c0_65] : memref<4x1xi32, #tpu.memory_space<vmem>>, vector<4x1xi32>
      %139 = arith.addi %138, %137 : vector<4x1xi32>
      %140 = vector.broadcast %139 : vector<4x1xi32> to vector<4x32xi32>
      %141 = arith.cmpi eq, %134, %140 : vector<4x32xi32>
      %142 = arith.extui %141 : vector<4x32xi1> to vector<4x32xi32>
      %143 = arith.sitofp %142 : vector<4x32xi32> to vector<4x32xf32>
      %144 = arith.truncf %143 : vector<4x32xf32> to vector<4x32xbf16>
      %145 = arith.truncf %129 : vector<32x32xf32> to vector<32x32xbf16>
      %cst_66 = arith.constant dense<0.000000e+00> : vector<4x32xf32>
      %146 = tpu.matmul %144, %145, %cst_66 {dimension_numbers = #tpu.dot_dimension_numbers<[1], [0], [0], [1], [0, 0, 1, 1], [], []>} : vector<4x32xbf16>, vector<32x32xbf16>, vector<4x32xf32> -> vector<4x32xf32>
      %c0_67 = arith.constant 0 : index
      %c0_68 = arith.constant 0 : index
      %147 = vector.load %arg17[%c0_67, %c0_68] : memref<1x32xf32, #tpu.memory_space<vmem>>, vector<1x32xf32>
      %c0_69 = arith.constant 0 : index
      %c0_70 = arith.constant 0 : index
      %148 = vector.load %arg18[%c0_69, %c0_70] : memref<1x32xf32, #tpu.memory_space<vmem>>, vector<1x32xf32>
      %cst_71 = arith.constant dense<0.000000e+00> : vector<4xf32>
      %149 = vector.multi_reduction <add>, %146, %cst_71 [1] : vector<4x32xf32> to vector<4xf32>
      %150 = vector.shape_cast %149 : vector<4xf32> to vector<4x1xf32>
      %cst_72 = arith.constant 3.200000e+01 : f32
      %151 = vector.broadcast %cst_72 : f32 to vector<4x1xf32>
      %152 = arith.divf %150, %151 : vector<4x1xf32>
      %153 = vector.broadcast %152 : vector<4x1xf32> to vector<4x32xf32>
      %154 = arith.subf %146, %153 : vector<4x32xf32>
      %155 = arith.mulf %154, %154 : vector<4x32xf32>
      %cst_73 = arith.constant dense<0.000000e+00> : vector<4xf32>
      %156 = vector.multi_reduction <add>, %155, %cst_73 [1] : vector<4x32xf32> to vector<4xf32>
      %157 = vector.shape_cast %156 : vector<4xf32> to vector<4x1xf32>
      %cst_74 = arith.constant 3.200000e+01 : f32
      %158 = vector.broadcast %cst_74 : f32 to vector<4x1xf32>
      %159 = arith.divf %157, %158 : vector<4x1xf32>
      %160 = vector.broadcast %152 : vector<4x1xf32> to vector<4x32xf32>
      %161 = arith.subf %146, %160 : vector<4x32xf32>
      %cst_75 = arith.constant 9.99999974E-6 : f32
      %162 = vector.broadcast %cst_75 : f32 to vector<4x1xf32>
      %163 = arith.addf %159, %162 : vector<4x1xf32>
      %164 = math.rsqrt %163 : vector<4x1xf32>
      %165 = vector.broadcast %164 : vector<4x1xf32> to vector<4x32xf32>
      %166 = arith.mulf %161, %165 : vector<4x32xf32>
      %167 = vector.broadcast %147 : vector<1x32xf32> to vector<4x32xf32>
      %168 = arith.mulf %166, %167 : vector<4x32xf32>
      %169 = vector.broadcast %148 : vector<1x32xf32> to vector<4x32xf32>
      %170 = arith.addf %168, %169 : vector<4x32xf32>
      %171 = arith.truncf %170 : vector<4x32xf32> to vector<4x32xbf16>
      %c0_76 = arith.constant 0 : index
      %c0_77 = arith.constant 0 : index
      %172 = vector.load %arg19[%c0_76, %c0_77] : memref<32x32xbf16, #tpu.memory_space<vmem>>, vector<32x32xbf16>
      %cst_78 = arith.constant dense<0.000000e+00> : vector<4x32xf32>
      %173 = tpu.matmul %171, %172, %cst_78 {dimension_numbers = #tpu.dot_dimension_numbers<[1], [0], [0], [1], [0, 0, 1, 1], [], []>} : vector<4x32xbf16>, vector<32x32xbf16>, vector<4x32xf32> -> vector<4x32xf32>
      %c0_79 = arith.constant 0 : index
      %c0_80 = arith.constant 0 : index
      %174 = vector.load %arg20[%c0_79, %c0_80] : memref<4x32xf32, #tpu.memory_space<vmem>>, vector<4x32xf32>
      tpu.vector_store %arg20[%c0_79, %c0_80], %173 {strides = array<i32>} : memref<4x32xf32, #tpu.memory_space<vmem>>, vector<4x32xf32>,
    } else {
    }
    return
  }
  func.func @transform_0(%arg0: i32) -> (i32, i32) {
    %c0_i32 = arith.constant 0 : i32
    %c0_i32_0 = arith.constant 0 : i32
    %c0_i32_1 = arith.constant 0 : i32
    return %c0_i32, %c0_i32_0 : i32, i32
  }
  func.func @transform_1(%arg0: i32) -> (i32, i32) {
    %c0_i32 = arith.constant 0 : i32
    %c0_i32_0 = arith.constant 0 : i32
    %c0_i32_1 = arith.constant 0 : i32
    return %c0_i32, %c0_i32_0 : i32, i32
  }
  func.func @transform_2(%arg0: i32) -> (i32, i32) {
    %c0_i32 = arith.constant 0 : i32
    %c0_i32_0 = arith.constant 0 : i32
    %c0_i32_1 = arith.constant 0 : i32
    return %c0_i32, %c0_i32_0 : i32, i32
  }
  func.func @transform_3(%arg0: i32) -> (i32, i32) {
    %c0_i32 = arith.constant 0 : i32
    %c0_i32_0 = arith.constant 0 : i32
    %c0_i32_1 = arith.constant 0 : i32
    return %c0_i32, %c0_i32_0 : i32, i32
  }
  func.func @transform_4(%arg0: i32) -> (i32, i32, i32) {
    %c0_i32 = arith.constant 0 : i32
    %c0_i32_0 = arith.constant 0 : i32
    %c0_i32_1 = arith.constant 0 : i32
    return %arg0, %c0_i32, %c0_i32_0 : i32, i32, i32
  }
  func.func @transform_5(%arg0: i32) -> (i32, i32, i32) {
    %c0_i32 = arith.constant 0 : i32
    %c0_i32_0 = arith.constant 0 : i32
    %c0_i32_1 = arith.constant 0 : i32
    return %arg0, %c0_i32, %c0_i32_0 : i32, i32, i32
  }
  func.func @transform_6(%arg0: i32) -> (i32, i32, i32) {
    %c0_i32 = arith.constant 0 : i32
    %c0_i32_0 = arith.constant 0 : i32
    %c0_i32_1 = arith.constant 0 : i32
    return %arg0, %c0_i32, %c0_i32_0 : i32, i32, i32
  }
  func.func @transform_7(%arg0: i32) -> (i32, i32, i32) {
    %c0_i32 = arith.constant 0 : i32
    %c0_i32_0 = arith.constant 0 : i32
    %c0_i32_1 = arith.constant 0 : i32
    return %arg0, %c0_i32, %c0_i32_0 : i32, i32, i32
  }
  func.func @transform_8(%arg0: i32) -> (i32, i32, i32) {
    %c0_i32 = arith.constant 0 : i32
    %c0_i32_0 = arith.constant 0 : i32
    %c0_i32_1 = arith.constant 0 : i32
    return %arg0, %c0_i32, %c0_i32_0 : i32, i32, i32
  }
  func.func @transform_9(%arg0: i32) -> (i32, i32, i32) {
    %c0_i32 = arith.constant 0 : i32
    %c0_i32_0 = arith.constant 0 : i32
    %c0_i32_1 = arith.constant 0 : i32
    return %arg0, %c0_i32, %c0_i32_0 : i32, i32, i32
  }
  func.func @transform_10(%arg0: i32) -> (i32, i32, i32) {
    %c0_i32 = arith.constant 0 : i32
    %c0_i32_0 = arith.constant 0 : i32
    %c0_i32_1 = arith.constant 0 : i32
    return %arg0, %c0_i32, %c0_i32_0 : i32, i32, i32
  }
  func.func @transform_11(%arg0: i32) -> (i32, i32, i32) {
    %c0_i32 = arith.constant 0 : i32
    %c0_i32_0 = arith.constant 0 : i32
    %c0_i32_1 = arith.constant 0 : i32
    return %arg0, %c0_i32, %c0_i32_0 : i32, i32, i32
  }
  func.func @transform_12(%arg0: i32) -> (i32, i32, i32) {
    %c0_i32 = arith.constant 0 : i32
    %c0_i32_0 = arith.constant 0 : i32
    %c0_i32_1 = arith.constant 0 : i32
    return %arg0, %c0_i32, %c0_i32_0 : i32, i32, i32
  }
  func.func @transform_13(%arg0: i32) -> (i32, i32, i32) {
    %c0_i32 = arith.constant 0 : i32
    %c0_i32_0 = arith.constant 0 : i32
    %c0_i32_1 = arith.constant 0 : i32
    return %arg0, %c0_i32, %c0_i32_0 : i32, i32, i32
  }
  func.func @transform_14(%arg0: i32) -> (i32, i32, i32) {
    %c0_i32 = arith.constant 0 : i32
    %c0_i32_0 = arith.constant 0 : i32
    %c0_i32_1 = arith.constant 0 : i32
    return %arg0, %c0_i32, %c0_i32_0 : i32, i32, i32
  }
  func.func @transform_15(%arg0: i32) -> (i32, i32, i32) {
    %c0_i32 = arith.constant 0 : i32
    %c0_i32_0 = arith.constant 0 : i32
    %c0_i32_1 = arith.constant 0 : i32
    return %arg0, %c0_i32, %c0_i32_0 : i32, i32, i32
  }
  func.func @transform_16(%arg0: i32) -> (i32, i32) {
    %c0_i32 = arith.constant 0 : i32
    %c0_i32_0 = arith.constant 0 : i32
    %c0_i32_1 = arith.constant 0 : i32
    return %c0_i32, %c0_i32_0 : i32, i32
  }
  func.func @transform_17(%arg0: i32) -> (i32, i32) {
    %c0_i32 = arith.constant 0 : i32
    %c0_i32_0 = arith.constant 0 : i32
    %c0_i32_1 = arith.constant 0 : i32
    return %c0_i32, %c0_i32_0 : i32, i32
  }
  func.func @transform_18(%arg0: i32) -> (i32, i32) {
    %c0_i32 = arith.constant 0 : i32
    %c0_i32_0 = arith.constant 0 : i32
    %c0_i32_1 = arith.constant 0 : i32
    return %c0_i32, %c0_i32_0 : i32, i32
  }
  func.func @transform_19(%arg0: i32) -> (i32, i32) {
    %c0_i32 = arith.constant 0 : i32
    %c0_i32_0 = arith.constant 0 : i32
    %c0_i32_1 = arith.constant 0 : i32
    return %c0_i32, %c0_i32_0 : i32, i32
  }
}

</mosaic_0001>

<llo_original>
// kernel: text_encoder_forward.1
$region0: #{text_encoder_forward.1}
  #allocation0 [shape = 'u32[]', space=smem, size = 0x4, offset = 0x4, fixed_abs, tag = 'smem constant byte address 0x4 - core index']
  #allocation1 [shape = 'u32[144,128]{1,0:T(1,128)}', space=vmem, size = 0x12000, scoped, tag = 'internal scratch']
  #allocation2 [shape = 'f32[32,32]{1,0:T(8,128)}', space=vmem, size = 0x4000, scoped, tag = 'scratch operand']
  %s0 = inlined_call_operand.hbm [shape: f32[32,32], index: 0, kind: input, shape index: {}]
  %s1 = inlined_call_operand.hbm [shape: s32[4,1], index: 1, kind: input, shape index: {}]
  %s2 = inlined_call_operand.hbm [shape: f32[128,32], index: 2, kind: input, shape index: {}]
  %s3 = inlined_call_operand.hbm [shape: f32[128,32], index: 3, kind: input, shape index: {}]
  %s4 = inlined_call_operand.hbm [shape: f32[2,1,32], index: 4, kind: input, shape index: {}]
  %s5 = inlined_call_operand.hbm [shape: f32[2,1,32], index: 5, kind: input, shape index: {}]
  %s6 = inlined_call_operand.hbm [shape: bf16[2,32,96], index: 6, kind: input, shape index: {}]
  %s7 = inlined_call_operand.hbm [shape: f32[2,1,96], index: 7, kind: input, shape index: {}]
  %s8 = inlined_call_operand.hbm [shape: bf16[2,32,32], index: 8, kind: input, shape index: {}]
  %s9 = inlined_call_operand.hbm [shape: f32[2,1,32], index: 9, kind: input, shape index: {}]
  %s10 = inlined_call_operand.hbm [shape: f32[2,1,32], index: 10, kind: input, shape index: {}]
  %s11 = inlined_call_operand.hbm [shape: f32[2,1,32], index: 11, kind: input, shape index: {}]
  %s12 = inlined_call_operand.hbm [shape: bf16[2,32,128], index: 12, kind: input, shape index: {}]
  %s13 = inlined_call_operand.hbm [shape: f32[2,1,128], index: 13, kind: input, shape index: {}]
  %s14 = inlined_call_operand.hbm [shape: bf16[2,128,32], index: 14, kind: input, shape index: {}]
  %s15 = inlined_call_operand.hbm [shape: f32[2,1,32], index: 15, kind: input, shape index: {}]
  %s16 = inlined_call_operand.hbm [shape: f32[1,32], index: 16, kind: input, shape index: {}]
  %s17 = inlined_call_operand.hbm [shape: f32[1,32], index: 17, kind: input, shape index: {}]
  %s18 = inlined_call_operand.hbm [shape: bf16[32,32], index: 18, kind: input, shape index: {}]
  %s19 = inlined_call_operand.hbm [shape: f32[4,32], index: 19, kind: output, shape index: {}]
  %s20 = sld [smem:[#allocation0]]
  $region193: #{text_encoder_forward.1} parent=0
    _
  %s22 = ssub.s32 1, %s20
  %s23 = scalar_select 0, %s22, %s20
  $region1: #{text_encoder_forward.1} parent=0
    #allocation3 [shape = 'u8[16384]{0}', space=vmem, size = 0x4000, scoped, tag = 'input window, operand 0, single buffered']
    #allocation4 [shape = 's32[2]{0}', space=sflag, size = 0x8, scoped, tag = 'scoped memory for text_encoder_forward.1']
    #allocation5 [shape = 's32[2]{0}', space=sflag, size = 0x8, scoped, tag = 'scoped memory for text_encoder_forward.1']
    #allocation6 [shape = 'u8[2048]{0}', space=vmem, size = 0x800, scoped, tag = 'input window, operand 1, single buffered']
    #allocation7 [shape = 's32[1]{0}', space=sflag, size = 0x4, scoped, tag = 'scoped memory for text_encoder_forward.1']
    #allocation8 [shape = 'u8[65536]{0}', space=vmem, size = 0x10000, scoped, tag = 'input window, operand 2, single buffered']
    #allocation9 [shape = 'u8[65536]{0}', space=vmem, size = 0x10000, scoped, tag = 'input window, operand 3, single buffered']
    #allocation10 [shape = 's32[1]{0}', space=sflag, size = 0x4, scoped, tag = 'scoped memory for text_encoder_forward.1']
    #allocation11 [shape = 'u8[1024]{0}', space=vmem, size = 0x400, scoped, tag = 'input window, operand 4']
    #allocation12 [shape = 'u8[1024]{0}', space=vmem, size = 0x400, scoped, tag = 'input window, operand 5']
    #allocation13 [shape = 'u8[16384]{0}', space=vmem, size = 0x4000, scoped, tag = 'input window, operand 6']
    #allocation14 [shape = 'u8[1024]{0}', space=vmem, size = 0x400, scoped, tag = 'input window, operand 7']
    #allocation15 [shape = 'u8[16384]{0}', space=vmem, size = 0x4000, scoped, tag = 'input window, operand 8']
    #allocation16 [shape = 'u8[1024]{0}', space=vmem, size = 0x400, scoped, tag = 'input window, operand 9']
    #allocation17 [shape = 'u8[1024]{0}', space=vmem, size = 0x400, scoped, tag = 'input window, operand 10']
    #allocation18 [shape = 'u8[1024]{0}', space=vmem, size = 0x400, scoped, tag = 'input window, operand 11']
    #allocation19 [shape = 'u8[16384]{0}', space=vmem, size = 0x4000, scoped, tag = 'input window, operand 12']
    #allocation20 [shape = 'u8[1024]{0}', space=vmem, size = 0x400, scoped, tag = 'input window, operand 13']
    #allocation21 [shape = 'u8[65536]{0}', space=vmem, size = 0x10000, scoped, tag = 'input window, operand 14']
    #allocation22 [shape = 'u8[1024]{0}', space=vmem, size = 0x400, scoped, tag = 'input window, operand 15']
    #allocation23 [shape = 'u8[512]{0}', space=vmem, size = 0x400, scoped, tag = 'input window, operand 16, single buffered']
    #allocation24 [shape = 'u8[512]{0}', space=vmem, size = 0x400, scoped, tag = 'input window, operand 17, single buffered']
    #allocation25 [shape = 'u8[8192]{0}', space=vmem, size = 0x2000, scoped, tag = 'input window, operand 18, single buffered']
    #allocation26 [shape = 's32[1]{0}', space=sflag, size = 0x4, scoped, tag = 'scoped memory for text_encoder_forward.1']
    #allocation27 [shape = 'u8[2048]{0}', space=vmem, size = 0x800, scoped, tag = 'output window, operand 0, single buffered']
    %24 = vsyncpa [#allocation4], 0
    %25 = vsyncpa [#allocation7], 0
    %26 = vsyncpa [#allocation10], 0
    %27 = vsyncpa [#allocation26], 0
    %28 = vsyncpa [#allocation5], 0
    loop: start=0, step=1, limit=4
    $region2: #{text_encoder_forward.1} parent=1 // loop_pre_header
      _
    $region3: #{text_encoder_forward.1} parent=1 // loop_header
      %s30 = sphi 0, %s34
      %p31 = scmp.ge.s32.totalorder %s30, 4
      %s38 = sphi 0, %s38
      %s40 = sphi 0, %s38
      %s41 = sphi 0, %s40
      %s55 = sphi 0, %s41
      %s59 = sphi 0, %s59
      %s61 = sphi 0, %s59
      %s62 = sphi 0, %s61
      %s76 = sphi 0, %s62
      %s80 = sphi 0, %s80
      %s82 = sphi 0, %s80
      %s83 = sphi 0, %s82
      %s97 = sphi 0, %s83
      %s101 = sphi 0, %s101
      %s103 = sphi 0, %s101
      %s104 = sphi 0, %s103
      %s118 = sphi 0, %s104
      %s124 = sphi 0, %s126
      %s127 = sphi 0, %s124
      %s128 = sphi 0, %s127
      %s144 = sphi 0, %s128
      %s150 = sphi 0, %s152
      %s153 = sphi 0, %s150
      %s154 = sphi 0, %s153
      %s170 = sphi 0, %s154
      %s176 = sphi 0, %s178
      %s179 = sphi 0, %s176
      %s180 = sphi 0, %s179
      %s196 = sphi 0, %s180
      %s202 = sphi 0, %s204
      %s205 = sphi 0, %s202
      %s206 = sphi 0, %s205
      %s222 = sphi 0, %s206
      %s228 = sphi 0, %s230
      %s231 = sphi 0, %s228
      %s232 = sphi 0, %s231
      %s248 = sphi 0, %s232
      %s254 = sphi 0, %s256
      %s257 = sphi 0, %s254
      %s258 = sphi 0, %s257
      %s274 = sphi 0, %s258
      %s280 = sphi 0, %s282
      %s283 = sphi 0, %s280
      %s284 = sphi 0, %s283
      %s300 = sphi 0, %s284
      %s306 = sphi 0, %s308
      %s309 = sphi 0, %s306
      %s310 = sphi 0, %s309
      %s326 = sphi 0, %s310
      %s332 = sphi 0, %s334
      %s335 = sphi 0, %s332
      %s336 = sphi 0, %s335
      %s352 = sphi 0, %s336
      %s358 = sphi 0, %s360
      %s361 = sphi 0, %s358
      %s362 = sphi 0, %s361
      %s378 = sphi 0, %s362
      %s384 = sphi 0, %s386
      %s387 = sphi 0, %s384
      %s388 = sphi 0, %s387
      %s404 = sphi 0, %s388
      %s410 = sphi 0, %s412
      %s413 = sphi 0, %s410
      %s414 = sphi 0, %s413
      %s430 = sphi 0, %s414
      %s434 = sphi 0, %s434
      %s436 = sphi 0, %s434
      %s437 = sphi 0, %s436
      %s451 = sphi 0, %s437
      %s455 = sphi 0, %s455
      %s457 = sphi 0, %s455
      %s458 = sphi 0, %s457
      %s472 = sphi 0, %s458
      %s476 = sphi 0, %s476
      %s478 = sphi 0, %s476
      %s479 = sphi 0, %s478
      %s493 = sphi 0, %s479
      %s497 = sphi 0, %s497
      %s499 = sphi 0, %s497
      %s500 = sphi 0, %s499
      %s514 = sphi 0, %s500
    $region4: #{text_encoder_forward.1} parent=1 // loop_header_branch
      %33 = sbr.rel (%p31) target = $region8
    $region5: #{text_encoder_forward.1} parent=1 // loop_body
      %s35 = ssub.s32 %s30, 1
      %s36 = ssub.s32 %s30, 2
      %s37 = sadd.s32 %s30, 1
      %s39 = sadd.s32 %s38, 1
      %p42 = scmp.eq.s32.totalorder %s30, 1
      %p43 = scmp.ne.s32.totalorder %s38, %s40
      %p44 = scmp.eq.s32.totalorder %s30, 0
      %p45 = por %p43, %p44
      %p46 = scmp.ne.s32.totalorder %s38, %s40
      %p47 = scmp.eq.s32.totalorder %s35, 1
      %p48 = por %p46, %p47
      %p49 = scmp.ne.s32.totalorder %s40, %s41
      %p50 = scmp.eq.s32.totalorder %s35, 0
      %p51 = por %p49, %p50
      %p52 = scmp.ne.s32.totalorder %s40, %s41
      %p53 = scmp.eq.s32.totalorder %s36, 1
      %p54 = por %p52, %p53
      %p56 = scmp.ne.s32.totalorder %s41, %s55
      %p57 = scmp.eq.s32.totalorder %s36, 0
      %p58 = por %p56, %p57
      %s60 = sadd.s32 %s59, 1
      %p63 = scmp.eq.s32.totalorder %s30, 1
      %p64 = scmp.ne.s32.totalorder %s59, %s61
      %p65 = scmp.eq.s32.totalorder %s30, 0
      %p66 = por %p64, %p65
      %p67 = scmp.ne.s32.totalorder %s59, %s61
      %p68 = scmp.eq.s32.totalorder %s35, 1
      %p69 = por %p67, %p68
      %p70 = scmp.ne.s32.totalorder %s61, %s62
      %p71 = scmp.eq.s32.totalorder %s35, 0
      %p72 = por %p70, %p71
      %p73 = scmp.ne.s32.totalorder %s61, %s62
      %p74 = scmp.eq.s32.totalorder %s36, 1
      %p75 = por %p73, %p74
      %p77 = scmp.ne.s32.totalorder %s62, %s76
      %p78 = scmp.eq.s32.totalorder %s36, 0
      %p79 = por %p77, %p78
      %s81 = sadd.s32 %s80, 1
      %p84 = scmp.eq.s32.totalorder %s30, 1
      %p85 = scmp.ne.s32.totalorder %s80, %s82
      %p86 = scmp.eq.s32.totalorder %s30, 0
      %p87 = por %p85, %p86
      %p88 = scmp.ne.s32.totalorder %s80, %s82
      %p89 = scmp.eq.s32.totalorder %s35, 1
      %p90 = por %p88, %p89
      %p91 = scmp.ne.s32.totalorder %s82, %s83
      %p92 = scmp.eq.s32.totalorder %s35, 0
      %p93 = por %p91, %p92
      %p94 = scmp.ne.s32.totalorder %s82, %s83
      %p95 = scmp.eq.s32.totalorder %s36, 1
      %p96 = por %p94, %p95
      %p98 = scmp.ne.s32.totalorder %s83, %s97
      %p99 = scmp.eq.s32.totalorder %s36, 0
      %p100 = por %p98, %p99
      %s102 = sadd.s32 %s101, 1
      %p105 = scmp.eq.s32.totalorder %s30, 1
      %p106 = scmp.ne.s32.totalorder %s101, %s103
      %p107 = scmp.eq.s32.totalorder %s30, 0
      %p108 = por %p106, %p107
      %p109 = scmp.ne.s32.totalorder %s101, %s103
      %p110 = scmp.eq.s32.totalorder %s35, 1
      %p111 = por %p109, %p110
      %p112 = scmp.ne.s32.totalorder %s103, %s104
      %p113 = scmp.eq.s32.totalorder %s35, 0
      %p114 = por %p112, %p113
      %p115 = scmp.ne.s32.totalorder %s103, %s104
      %p116 = scmp.eq.s32.totalorder %s36, 1
      %p117 = por %p115, %p116
      %p119 = scmp.ne.s32.totalorder %s104, %s118
      %p120 = scmp.eq.s32.totalorder %s36, 0
      %p121 = por %p119, %p120
      %s122 = ssub.s32 %s30, %s37
      %p123 = scmp.eq.s32.totalorder %s122, 0
      %s125 = sadd.s32 %s124, 1
      %s126 = scalar_select %p123, %s124, %s125
      %p129 = pneg %p123
      %p130 = scmp.eq.s32.totalorder %s30, 1
      %p131 = por %p129, %p130
      %p132 = scmp.ne.s32.totalorder %s124, %s127
      %p133 = scmp.eq.s32.totalorder %s30, 0
      %p134 = por %p132, %p133
      %p135 = scmp.ne.s32.totalorder %s124, %s127
      %p136 = scmp.eq.s32.totalorder %s35, 1
      %p137 = por %p135, %p136
      %p138 = scmp.ne.s32.totalorder %s127, %s128
      %p139 = scmp.eq.s32.totalorder %s35, 0
      %p140 = por %p138, %p139
      %p141 = scmp.ne.s32.totalorder %s127, %s128
      %p142 = scmp.eq.s32.totalorder %s36, 1
      %p143 = por %p141, %p142
      %p145 = scmp.ne.s32.totalorder %s128, %s144
      %p146 = scmp.eq.s32.totalorder %s36, 0
      %p147 = por %p145, %p146
      %s148 = ssub.s32 %s30, %s37
      %p149 = scmp.eq.s32.totalorder %s148, 0
      %s151 = sadd.s32 %s150, 1
      %s152 = scalar_select %p149, %s150, %s151
      %p155 = pneg %p149
      %p156 = scmp.eq.s32.totalorder %s30, 1
      %p157 = por %p155, %p156
      %p158 = scmp.ne.s32.totalorder %s150, %s153
      %p159 = scmp.eq.s32.totalorder %s30, 0
      %p160 = por %p158, %p159
      %p161 = scmp.ne.s32.totalorder %s150, %s153
      %p162 = scmp.eq.s32.totalorder %s35, 1
      %p163 = por %p161, %p162
      %p164 = scmp.ne.s32.totalorder %s153, %s154
      %p165 = scmp.eq.s32.totalorder %s35, 0
      %p166 = por %p164, %p165
      %p167 = scmp.ne.s32.totalorder %s153, %s154
      %p168 = scmp.eq.s32.totalorder %s36, 1
      %p169 = por %p167, %p168
      %p171 = scmp.ne.s32.totalorder %s154, %s170
      %p172 = scmp.eq.s32.totalorder %s36, 0
      %p173 = por %p171, %p172
      %s174 = ssub.s32 %s30, %s37
      %p175 = scmp.eq.s32.totalorder %s174, 0
      %s177 = sadd.s32 %s176, 1
      %s178 = scalar_select %p175, %s176, %s177
      %p181 = pneg %p175
      %p182 = scmp.eq.s32.totalorder %s30, 1
      %p183 = por %p181, %p182
      %p184 = scmp.ne.s32.totalorder %s176, %s179
      %p185 = scmp.eq.s32.totalorder %s30, 0
      %p186 = por %p184, %p185
      %p187 = scmp.ne.s32.totalorder %s176, %s179
      %p188 = scmp.eq.s32.totalorder %s35, 1
      %p189 = por %p187, %p188
      %p190 = scmp.ne.s32.totalorder %s179, %s180
      %p191 = scmp.eq.s32.totalorder %s35, 0
      %p192 = por %p190, %p191
      %p193 = scmp.ne.s32.totalorder %s179, %s180
      %p194 = scmp.eq.s32.totalorder %s36, 1
      %p195 = por %p193, %p194
      %p197 = scmp.ne.s32.totalorder %s180, %s196
      %p198 = scmp.eq.s32.totalorder %s36, 0
      %p199 = por %p197, %p198
      %s200 = ssub.s32 %s30, %s37
      %p201 = scmp.eq.s32.totalorder %s200, 0
      %s203 = sadd.s32 %s202, 1
      %s204 = scalar_select %p201, %s202, %s203
      %p207 = pneg %p201
      %p208 = scmp.eq.s32.totalorder %s30, 1
      %p209 = por %p207, %p208
      %p210 = scmp.ne.s32.totalorder %s202, %s205
      %p211 = scmp.eq.s32.totalorder %s30, 0
      %p212 = por %p210, %p211
      %p213 = scmp.ne.s32.totalorder %s202, %s205
      %p214 = scmp.eq.s32.totalorder %s35, 1
      %p215 = por %p213, %p214
      %p216 = scmp.ne.s32.totalorder %s205, %s206
      %p217 = scmp.eq.s32.totalorder %s35, 0
      %p218 = por %p216, %p217
      %p219 = scmp.ne.s32.totalorder %s205, %s206
      %p220 = scmp.eq.s32.totalorder %s36, 1
      %p221 = por %p219, %p220
      %p223 = scmp.ne.s32.totalorder %s206, %s222
      %p224 = scmp.eq.s32.totalorder %s36, 0
      %p225 = por %p223, %p224
      %s226 = ssub.s32 %s30, %s37
      %p227 = scmp.eq.s32.totalorder %s226, 0
      %s229 = sadd.s32 %s228, 1
      %s230 = scalar_select %p227, %s228, %s229
      %p233 = pneg %p227
      %p234 = scmp.eq.s32.totalorder %s30, 1
      %p235 = por %p233, %p234
      %p236 = scmp.ne.s32.totalorder %s228, %s231
      %p237 = scmp.eq.s32.totalorder %s30, 0
      %p238 = por %p236, %p237
      %p239 = scmp.ne.s32.totalorder %s228, %s231
      %p240 = scmp.eq.s32.totalorder %s35, 1
      %p241 = por %p239, %p240
      %p242 = scmp.ne.s32.totalorder %s231, %s232
      %p243 = scmp.eq.s32.totalorder %s35, 0
      %p244 = por %p242, %p243
      %p245 = scmp.ne.s32.totalorder %s231, %s232
      %p246 = scmp.eq.s32.totalorder %s36, 1
      %p247 = por %p245, %p246
      %p249 = scmp.ne.s32.totalorder %s232, %s248
      %p250 = scmp.eq.s32.totalorder %s36, 0
      %p251 = por %p249, %p250
      %s252 = ssub.s32 %s30, %s37
      %p253 = scmp.eq.s32.totalorder %s252, 0
      %s255 = sadd.s32 %s254, 1
      %s256 = scalar_select %p253, %s254, %s255
      %p259 = pneg %p253
      %p260 = scmp.eq.s32.totalorder %s30, 1
      %p261 = por %p259, %p260
      %p262 = scmp.ne.s32.totalorder %s254, %s257
      %p263 = scmp.eq.s32.totalorder %s30, 0
      %p264 = por %p262, %p263
      %p265 = scmp.ne.s32.totalorder %s254, %s257
      %p266 = scmp.eq.s32.totalorder %s35, 1
      %p267 = por %p265, %p266
      %p268 = scmp.ne.s32.totalorder %s257, %s258
      %p269 = scmp.eq.s32.totalorder %s35, 0
      %p270 = por %p268, %p269
      %p271 = scmp.ne.s32.totalorder %s257, %s258
      %p272 = scmp.eq.s32.totalorder %s36, 1
      %p273 = por %p271, %p272
      %p275 = scmp.ne.s32.totalorder %s258, %s274
      %p276 = scmp.eq.s32.totalorder %s36, 0
      %p277 = por %p275, %p276
      %s278 = ssub.s32 %s30, %s37
      %p279 = scmp.eq.s32.totalorder %s278, 0
      %s281 = sadd.s32 %s280, 1
      %s282 = scalar_select %p279, %s280, %s281
      %p285 = pneg %p279
      %p286 = scmp.eq.s32.totalorder %s30, 1
      %p287 = por %p285, %p286
      %p288 = scmp.ne.s32.totalorder %s280, %s283
      %p289 = scmp.eq.s32.totalorder %s30, 0
      %p290 = por %p288, %p289
      %p291 = scmp.ne.s32.totalorder %s280, %s283
      %p292 = scmp.eq.s32.totalorder %s35, 1
      %p293 = por %p291, %p292
      %p294 = scmp.ne.s32.totalorder %s283, %s284
      %p295 = scmp.eq.s32.totalorder %s35, 0
      %p296 = por %p294, %p295
      %p297 = scmp.ne.s32.totalorder %s283, %s284
      %p298 = scmp.eq.s32.totalorder %s36, 1
      %p299 = por %p297, %p298
      %p301 = scmp.ne.s32.totalorder %s284, %s300
      %p302 = scmp.eq.s32.totalorder %s36, 0
      %p303 = por %p301, %p302
      %s304 = ssub.s32 %s30, %s37
      %p305 = scmp.eq.s32.totalorder %s304, 0
      %s307 = sadd.s32 %s306, 1
      %s308 = scalar_select %p305, %s306, %s307
      %p311 = pneg %p305
      %p312 = scmp.eq.s32.totalorder %s30, 1
      %p313 = por %p311, %p312
      %p314 = scmp.ne.s32.totalorder %s306, %s309
      %p315 = scmp.eq.s32.totalorder %s30, 0
      %p316 = por %p314, %p315
      %p317 = scmp.ne.s32.totalorder %s306, %s309
      %p318 = scmp.eq.s32.totalorder %s35, 1
      %p319 = por %p317, %p318
      %p320 = scmp.ne.s32.totalorder %s309, %s310
      %p321 = scmp.eq.s32.totalorder %s35, 0
      %p322 = por %p320, %p321
      %p323 = scmp.ne.s32.totalorder %s309, %s310
      %p324 = scmp.eq.s32.totalorder %s36, 1
      %p325 = por %p323, %p324
      %p327 = scmp.ne.s32.totalorder %s310, %s326
      %p328 = scmp.eq.s32.totalorder %s36, 0
      %p329 = por %p327, %p328
      %s330 = ssub.s32 %s30, %s37
      %p331 = scmp.eq.s32.totalorder %s330, 0
      %s333 = sadd.s32 %s332, 1
      %s334 = scalar_select %p331, %s332, %s333
      %p337 = pneg %p331
      %p338 = scmp.eq.s32.totalorder %s30, 1
      %p339 = por %p337, %p338
      %p340 = scmp.ne.s32.totalorder %s332, %s335
      %p341 = scmp.eq.s32.totalorder %s30, 0
      %p342 = por %p340, %p341
      %p343 = scmp.ne.s32.totalorder %s332, %s335
      %p344 = scmp.eq.s32.totalorder %s35, 1
      %p345 = por %p343, %p344
      %p346 = scmp.ne.s32.totalorder %s335, %s336
      %p347 = scmp.eq.s32.totalorder %s35, 0
      %p348 = por %p346, %p347
      %p349 = scmp.ne.s32.totalorder %s335, %s336
      %p350 = scmp.eq.s32.totalorder %s36, 1
      %p351 = por %p349, %p350
      %p353 = scmp.ne.s32.totalorder %s336, %s352
      %p354 = scmp.eq.s32.totalorder %s36, 0
      %p355 = por %p353, %p354
      %s356 = ssub.s32 %s30, %s37
      %p357 = scmp.eq.s32.totalorder %s356, 0
      %s359 = sadd.s32 %s358, 1
      %s360 = scalar_select %p357, %s358, %s359
      %p363 = pneg %p357
      %p364 = scmp.eq.s32.totalorder %s30, 1
      %p365 = por %p363, %p364
      %p366 = scmp.ne.s32.totalorder %s358, %s361
      %p367 = scmp.eq.s32.totalorder %s30, 0
      %p368 = por %p366, %p367
      %p369 = scmp.ne.s32.totalorder %s358, %s361
      %p370 = scmp.eq.s32.totalorder %s35, 1
      %p371 = por %p369, %p370
      %p372 = scmp.ne.s32.totalorder %s361, %s362
      %p373 = scmp.eq.s32.totalorder %s35, 0
      %p374 = por %p372, %p373
      %p375 = scmp.ne.s32.totalorder %s361, %s362
      %p376 = scmp.eq.s32.totalorder %s36, 1
      %p377 = por %p375, %p376
      %p379 = scmp.ne.s32.totalorder %s362, %s378
      %p380 = scmp.eq.s32.totalorder %s36, 0
      %p381 = por %p379, %p380
      %s382 = ssub.s32 %s30, %s37
      %p383 = scmp.eq.s32.totalorder %s382, 0
      %s385 = sadd.s32 %s384, 1
      %s386 = scalar_select %p383, %s384, %s385
      %p389 = pneg %p383
      %p390 = scmp.eq.s32.totalorder %s30, 1
      %p391 = por %p389, %p390
      %p392 = scmp.ne.s32.totalorder %s384, %s387
      %p393 = scmp.eq.s32.totalorder %s30, 0
      %p394 = por %p392, %p393
      %p395 = scmp.ne.s32.totalorder %s384, %s387
      %p396 = scmp.eq.s32.totalorder %s35, 1
      %p397 = por %p395, %p396
      %p398 = scmp.ne.s32.totalorder %s387, %s388
      %p399 = scmp.eq.s32.totalorder %s35, 0
      %p400 = por %p398, %p399
      %p401 = scmp.ne.s32.totalorder %s387, %s388
      %p402 = scmp.eq.s32.totalorder %s36, 1
      %p403 = por %p401, %p402
      %p405 = scmp.ne.s32.totalorder %s388, %s404
      %p406 = scmp.eq.s32.totalorder %s36, 0
      %p407 = por %p405, %p406
      %s408 = ssub.s32 %s30, %s37
      %p409 = scmp.eq.s32.totalorder %s408, 0
      %s411 = sadd.s32 %s410, 1
      %s412 = scalar_select %p409, %s410, %s411
      %p415 = pneg %p409
      %p416 = scmp.eq.s32.totalorder %s30, 1
      %p417 = por %p415, %p416
      %p418 = scmp.ne.s32.totalorder %s410, %s413
      %p419 = scmp.eq.s32.totalorder %s30, 0
      %p420 = por %p418, %p419
      %p421 = scmp.ne.s32.totalorder %s410, %s413
      %p422 = scmp.eq.s32.totalorder %s35, 1
      %p423 = por %p421, %p422
      %p424 = scmp.ne.s32.totalorder %s413, %s414
      %p425 = scmp.eq.s32.totalorder %s35, 0
      %p426 = por %p424, %p425
      %p427 = scmp.ne.s32.totalorder %s413, %s414
      %p428 = scmp.eq.s32.totalorder %s36, 1
      %p429 = por %p427, %p428
      %p431 = scmp.ne.s32.totalorder %s414, %s430
      %p432 = scmp.eq.s32.totalorder %s36, 0
      %p433 = por %p431, %p432
      %s435 = sadd.s32 %s434, 1
      %p438 = scmp.eq.s32.totalorder %s30, 1
      %p439 = scmp.ne.s32.totalorder %s434, %s436
      %p440 = scmp.eq.s32.totalorder %s30, 0
      %p441 = por %p439, %p440
      %p442 = scmp.ne.s32.totalorder %s434, %s436
      %p443 = scmp.eq.s32.totalorder %s35, 1
      %p444 = por %p442, %p443
      %p445 = scmp.ne.s32.totalorder %s436, %s437
      %p446 = scmp.eq.s32.totalorder %s35, 0
      %p447 = por %p445, %p446
      %p448 = scmp.ne.s32.totalorder %s436, %s437
      %p449 = scmp.eq.s32.totalorder %s36, 1
      %p450 = por %p448, %p449
      %p452 = scmp.ne.s32.totalorder %s437, %s451
      %p453 = scmp.eq.s32.totalorder %s36, 0
      %p454 = por %p452, %p453
      %s456 = sadd.s32 %s455, 1
      %p459 = scmp.eq.s32.totalorder %s30, 1
      %p460 = scmp.ne.s32.totalorder %s455, %s457
      %p461 = scmp.eq.s32.totalorder %s30, 0
      %p462 = por %p460, %p461
      %p463 = scmp.ne.s32.totalorder %s455, %s457
      %p464 = scmp.eq.s32.totalorder %s35, 1
      %p465 = por %p463, %p464
      %p466 = scmp.ne.s32.totalorder %s457, %s458
      %p467 = scmp.eq.s32.totalorder %s35, 0
      %p468 = por %p466, %p467
      %p469 = scmp.ne.s32.totalorder %s457, %s458
      %p470 = scmp.eq.s32.totalorder %s36, 1
      %p471 = por %p469, %p470
      %p473 = scmp.ne.s32.totalorder %s458, %s472
      %p474 = scmp.eq.s32.totalorder %s36, 0
      %p475 = por %p473, %p474
      %s477 = sadd.s32 %s476, 1
      %p480 = scmp.eq.s32.totalorder %s30, 1
      %p481 = scmp.ne.s32.totalorder %s476, %s478
      %p482 = scmp.eq.s32.totalorder %s30, 0
      %p483 = por %p481, %p482
      %p484 = scmp.ne.s32.totalorder %s476, %s478
      %p485 = scmp.eq.s32.totalorder %s35, 1
      %p486 = por %p484, %p485
      %p487 = scmp.ne.s32.totalorder %s478, %s479
      %p488 = scmp.eq.s32.totalorder %s35, 0
      %p489 = por %p487, %p488
      %p490 = scmp.ne.s32.totalorder %s478, %s479
      %p491 = scmp.eq.s32.totalorder %s36, 1
      %p492 = por %p490, %p491
      %p494 = scmp.ne.s32.totalorder %s479, %s493
      %p495 = scmp.eq.s32.totalorder %s36, 0
      %p496 = por %p494, %p495
      %s498 = sadd.s32 %s497, 1
      %p501 = scmp.eq.s32.totalorder %s30, 1
      %p502 = scmp.ne.s32.totalorder %s497, %s499
      %p503 = scmp.eq.s32.totalorder %s30, 0
      %p504 = por %p502, %p503
      %p505 = scmp.ne.s32.totalorder %s497, %s499
      %p506 = scmp.eq.s32.totalorder %s35, 1
      %p507 = por %p505, %p506
      %p508 = scmp.ne.s32.totalorder %s499, %s500
      %p509 = scmp.eq.s32.totalorder %s35, 0
      %p510 = por %p508, %p509
      %p511 = scmp.ne.s32.totalorder %s499, %s500
      %p512 = scmp.eq.s32.totalorder %s36, 1
      %p513 = por %p511, %p512
      %p515 = scmp.ne.s32.totalorder %s500, %s514
      %p516 = scmp.eq.s32.totalorder %s36, 0
      %p517 = por %p515, %p516
      %p518 = scmp.le.s32.totalorder 1, %s30
      %p519 = scmp.lt.s32.totalorder %s30, 3
      %p520 = pnand %p518, %p519
      %p521 = pneg %p520
      // Predicated region
      $region9: #{text_encoder_forward.1} parent=5 // pred_check
        _
      $region10: #{text_encoder_forward.1} parent=5 // pred_check_branch
        %523 = sbr.rel (%p520) target = $region12
      $region11: #{text_encoder_forward.1} parent=5 // pred_region
        %s524 = ssub.s32 %s30, 1
        // Predicated region
        $region13: #{text_encoder_forward.1} parent=11 // pred_check
          %p525 = pneg %p51
        $region14: #{text_encoder_forward.1} parent=11 // pred_check_branch
          %527 = sbr.rel (%p525) target = $region16
        $region15: #{text_encoder_forward.1} parent=11 // pred_region
          %s529 = ssub.s32 512, 512
          %530 = vsyncadd [#allocation4], %s529
          %s531 = sshll.u32 [#allocation3], 4
          %s532 = int_to_ptr.vmem [resolvable:$true] %s531
          %537 = dma.hbm_to_vmem [thread:$0]  %s0, 512, %s532, [#allocation4], 128, 128, 8
        $region16: #{text_encoder_forward.1} parent=11 // pred_fallthru
          _
        // Predicated region
        $region17: #{text_encoder_forward.1} parent=11 // pred_check
          %p538 = pneg %p72
        $region18: #{text_encoder_forward.1} parent=11 // pred_check_branch
          %540 = sbr.rel (%p538) target = $region20
        $region19: #{text_encoder_forward.1} parent=11 // pred_region
          %s542 = ssub.s32 64, 64
          %543 = vsyncadd [#allocation7], %s542
          %s545 = sshll.u32 [#allocation6], 4
          %s546 = int_to_ptr.vmem [resolvable:$true] %s545
          %548 = dma.hbm_to_vmem [thread:$0]  %s1, 64, %s546, [#allocation7]
        $region20: #{text_encoder_forward.1} parent=11 // pred_fallthru
          _
        // Predicated region
        $region21: #{text_encoder_forward.1} parent=11 // pred_check
          %p549 = pneg %p93
        $region22: #{text_encoder_forward.1} parent=11 // pred_check_branch
          %551 = sbr.rel (%p549) target = $region24
        $region23: #{text_encoder_forward.1} parent=11 // pred_region
          %s553 = ssub.s32 2048, 2048
          %554 = vsyncadd [#allocation7], %s553
          %s555 = sshll.u32 [#allocation8], 4
          %s556 = int_to_ptr.vmem [resolvable:$true] %s555
          %561 = dma.hbm_to_vmem [thread:$0]  %s2, 2048, %s556, [#allocation7], 128, 128, 8
        $region24: #{text_encoder_forward.1} parent=11 // pred_fallthru
          _
        // Predicated region
        $region25: #{text_encoder_forward.1} parent=11 // pred_check
          %p562 = pneg %p114
        $region26: #{text_encoder_forward.1} parent=11 // pred_check_branch
          %564 = sbr.rel (%p562) target = $region28
        $region27: #{text_encoder_forward.1} parent=11 // pred_region
          %s566 = ssub.s32 2048, 2048
          %567 = vsyncadd [#allocation10], %s566
          %s568 = sshll.u32 [#allocation9], 4
          %s569 = int_to_ptr.vmem [resolvable:$true] %s568
          %574 = dma.hbm_to_vmem [thread:$0]  %s3, 2048, %s569, [#allocation10], 128, 128, 8
        $region28: #{text_encoder_forward.1} parent=11 // pred_fallthru
          _
        // Predicated region
        $region29: #{text_encoder_forward.1} parent=11 // pred_check
          %p575 = pneg %p447
        $region30: #{text_encoder_forward.1} parent=11 // pred_check_branch
          %577 = sbr.rel (%p575) target = $region32
        $region31: #{text_encoder_forward.1} parent=11 // pred_region
          %s579 = ssub.s32 16, 16
          %580 = vsyncadd [#allocation7], %s579
          %s582 = sshll.u32 [#allocation23], 4
          %s583 = int_to_ptr.vmem [resolvable:$true] %s582
          %585 = dma.hbm_to_vmem [thread:$0]  %s16, 16, %s583, [#allocation7]
        $region32: #{text_encoder_forward.1} parent=11 // pred_fallthru
          _
        // Predicated region
        $region33: #{text_encoder_forward.1} parent=11 // pred_check
          %p586 = pneg %p468
        $region34: #{text_encoder_forward.1} parent=11 // pred_check_branch
          %588 = sbr.rel (%p586) target = $region36
        $region35: #{text_encoder_forward.1} parent=11 // pred_region
          %s590 = ssub.s32 16, 16
          %591 = vsyncadd [#allocation10], %s590
          %s593 = sshll.u32 [#allocation24], 4
          %s594 = int_to_ptr.vmem [resolvable:$true] %s593
          %596 = dma.hbm_to_vmem [thread:$0]  %s17, 16, %s594, [#allocation10]
        $region36: #{text_encoder_forward.1} parent=11 // pred_fallthru
          _
        // Predicated region
        $region37: #{text_encoder_forward.1} parent=11 // pred_check
          %p597 = pneg %p489
        $region38: #{text_encoder_forward.1} parent=11 // pred_check_branch
          %599 = sbr.rel (%p597) target = $region40
        $region39: #{text_encoder_forward.1} parent=11 // pred_region
          %s601 = ssub.s32 256, 256
          %602 = vsyncadd [#allocation26], %s601
          %s603 = sshll.u32 [#allocation25], 4
          %s604 = int_to_ptr.vmem [resolvable:$true] %s603
          %609 = dma.hbm_to_vmem [thread:$0]  %s18, 256, %s604, [#allocation26], 64, 64, 4
        $region40: #{text_encoder_forward.1} parent=11 // pred_fallthru
          _
      $region12: #{text_encoder_forward.1} parent=5 // pred_fallthru
        _
      %p610 = scmp.lt.s32.totalorder %s30, 2
      // Predicated region
      $region41: #{text_encoder_forward.1} parent=5 // pred_check
        %p611 = pneg %p610
      $region42: #{text_encoder_forward.1} parent=5 // pred_check_branch
        %613 = sbr.rel (%p611) target = $region44
      $region43: #{text_encoder_forward.1} parent=5 // pred_region
        // Predicated region
        $region45: #{text_encoder_forward.1} parent=43 // pred_check
          %p614 = pneg %p134
        $region46: #{text_encoder_forward.1} parent=43 // pred_check_branch
          %616 = sbr.rel (%p614) target = $region48
        $region47: #{text_encoder_forward.1} parent=43 // pred_region
          %s617 = sand.u32 %s30, 1
          %s618 = scalar_lea.sflag [#allocation4], %s617
          %s619 = sand.u32 %s124, 1
          %s620 = scalar_lea.vmem [#allocation11], %s619
          %s622 = ssub.s32 16, 16
          %623 = vsyncadd %s618, %s622
          %s624 = smul.addr %s30, 16
          %s625 = scalar_lea.hbm %s4, %s624
          %s627 = sshll.u32 %s620, 4
          %s628 = int_to_ptr.vmem [resolvable:$true] %s627
          %630 = dma.hbm_to_vmem [thread:$0]  %s625, 16, %s628, %s618
        $region48: #{text_encoder_forward.1} parent=43 // pred_fallthru
          _
        // Predicated region
        $region49: #{text_encoder_forward.1} parent=43 // pred_check
          %p631 = pneg %p160
        $region50: #{text_encoder_forward.1} parent=43 // pred_check_branch
          %633 = sbr.rel (%p631) target = $region52
        $region51: #{text_encoder_forward.1} parent=43 // pred_region
          %s634 = sand.u32 %s30, 1
          %s635 = scalar_lea.sflag [#allocation4], %s634
          %s636 = sand.u32 %s150, 1
          %s637 = scalar_lea.vmem [#allocation12], %s636
          %s639 = ssub.s32 16, 16
          %640 = vsyncadd %s635, %s639
          %s641 = smul.addr %s30, 16
          %s642 = scalar_lea.hbm %s5, %s641
          %s644 = sshll.u32 %s637, 4
          %s645 = int_to_ptr.vmem [resolvable:$true] %s644
          %647 = dma.hbm_to_vmem [thread:$0]  %s642, 16, %s645, %s635
        $region52: #{text_encoder_forward.1} parent=43 // pred_fallthru
          _
        // Predicated region
        $region53: #{text_encoder_forward.1} parent=43 // pred_check
          %p648 = pneg %p186
        $region54: #{text_encoder_forward.1} parent=43 // pred_check_branch
          %650 = sbr.rel (%p648) target = $region56
        $region55: #{text_encoder_forward.1} parent=43 // pred_region
          %s651 = sand.u32 %s30, 1
          %s652 = scalar_lea.sflag [#allocation4], %s651
          %s653 = sand.u32 %s176, 1
          %s654 = smul.addr %s653, 16
          %s655 = scalar_lea.vmem [#allocation13], %s654
          %s657 = ssub.s32 256, 256
          %658 = vsyncadd %s652, %s657
          %s659 = smul.addr %s30, 4
          %s660 = smul.addr %s659, 64
          %s661 = scalar_lea.hbm %s6, %s660
          %s662 = sshll.u32 %s655, 4
          %s663 = int_to_ptr.vmem [resolvable:$true] %s662
          %668 = dma.hbm_to_vmem [thread:$0]  %s661, 256, %s663, %s652, 64, 64, 4
        $region56: #{text_encoder_forward.1} parent=43 // pred_fallthru
          _
        // Predicated region
        $region57: #{text_encoder_forward.1} parent=43 // pred_check
          %p669 = pneg %p212
        $region58: #{text_encoder_forward.1} parent=43 // pred_check_branch
          %671 = sbr.rel (%p669) target = $region60
        $region59: #{text_encoder_forward.1} parent=43 // pred_region
          %s672 = sand.u32 %s30, 1
          %s673 = scalar_lea.sflag [#allocation4], %s672
          %s674 = sand.u32 %s202, 1
          %s675 = scalar_lea.vmem [#allocation14], %s674
          %s677 = ssub.s32 16, 16
          %678 = vsyncadd %s673, %s677
          %s679 = smul.addr %s30, 16
          %s680 = scalar_lea.hbm %s7, %s679
          %s682 = sshll.u32 %s675, 4
          %s683 = int_to_ptr.vmem [resolvable:$true] %s682
          %685 = dma.hbm_to_vmem [thread:$0]  %s680, 16, %s683, %s673
        $region60: #{text_encoder_forward.1} parent=43 // pred_fallthru
          _
        // Predicated region
        $region61: #{text_encoder_forward.1} parent=43 // pred_check
          %p686 = pneg %p238
        $region62: #{text_encoder_forward.1} parent=43 // pred_check_branch
          %688 = sbr.rel (%p686) target = $region64
        $region63: #{text_encoder_forward.1} parent=43 // pred_region
          %s689 = sand.u32 %s30, 1
          %s690 = scalar_lea.sflag [#allocation4], %s689
          %s691 = sand.u32 %s228, 1
          %s692 = smul.addr %s691, 16
          %s693 = scalar_lea.vmem [#allocation15], %s692
          %s695 = ssub.s32 256, 256
          %696 = vsyncadd %s690, %s695
          %s697 = smul.addr %s30, 4
          %s698 = smul.addr %s697, 64
          %s699 = scalar_lea.hbm %s8, %s698
          %s700 = sshll.u32 %s693, 4
          %s701 = int_to_ptr.vmem [resolvable:$true] %s700
          %706 = dma.hbm_to_vmem [thread:$0]  %s699, 256, %s701, %s690, 64, 64, 4
        $region64: #{text_encoder_forward.1} parent=43 // pred_fallthru
          _
        // Predicated region
        $region65: #{text_encoder_forward.1} parent=43 // pred_check
          %p707 = pneg %p264
        $region66: #{text_encoder_forward.1} parent=43 // pred_check_branch
          %709 = sbr.rel (%p707) target = $region68
        $region67: #{text_encoder_forward.1} parent=43 // pred_region
          %s710 = sand.u32 %s30, 1
          %s711 = scalar_lea.sflag [#allocation4], %s710
          %s712 = sand.u32 %s254, 1
          %s713 = scalar_lea.vmem [#allocation16], %s712
          %s715 = ssub.s32 16, 16
          %716 = vsyncadd %s711, %s715
          %s717 = smul.addr %s30, 16
          %s718 = scalar_lea.hbm %s9, %s717
          %s720 = sshll.u32 %s713, 4
          %s721 = int_to_ptr.vmem [resolvable:$true] %s720
          %723 = dma.hbm_to_vmem [thread:$0]  %s718, 16, %s721, %s711
        $region68: #{text_encoder_forward.1} parent=43 // pred_fallthru
          _
        // Predicated region
        $region69: #{text_encoder_forward.1} parent=43 // pred_check
          %p724 = pneg %p290
        $region70: #{text_encoder_forward.1} parent=43 // pred_check_branch
          %726 = sbr.rel (%p724) target = $region72
        $region71: #{text_encoder_forward.1} parent=43 // pred_region
          %s727 = sand.u32 %s30, 1
          %s728 = scalar_lea.sflag [#allocation4], %s727
          %s729 = sand.u32 %s280, 1
          %s730 = scalar_lea.vmem [#allocation17], %s729
          %s732 = ssub.s32 16, 16
          %733 = vsyncadd %s728, %s732
          %s734 = smul.addr %s30, 16
          %s735 = scalar_lea.hbm %s10, %s734
          %s737 = sshll.u32 %s730, 4
          %s738 = int_to_ptr.vmem [resolvable:$true] %s737
          %740 = dma.hbm_to_vmem [thread:$0]  %s735, 16, %s738, %s728
        $region72: #{text_encoder_forward.1} parent=43 // pred_fallthru
          _
        // Predicated region
        $region73: #{text_encoder_forward.1} parent=43 // pred_check
          %p741 = pneg %p316
        $region74: #{text_encoder_forward.1} parent=43 // pred_check_branch
          %743 = sbr.rel (%p741) target = $region76
        $region75: #{text_encoder_forward.1} parent=43 // pred_region
          %s744 = sand.u32 %s30, 1
          %s745 = scalar_lea.sflag [#allocation4], %s744
          %s746 = sand.u32 %s306, 1
          %s747 = scalar_lea.vmem [#allocation18], %s746
          %s749 = ssub.s32 16, 16
          %750 = vsyncadd %s745, %s749
          %s751 = smul.addr %s30, 16
          %s752 = scalar_lea.hbm %s11, %s751
          %s754 = sshll.u32 %s747, 4
          %s755 = int_to_ptr.vmem [resolvable:$true] %s754
          %757 = dma.hbm_to_vmem [thread:$0]  %s752, 16, %s755, %s745
        $region76: #{text_encoder_forward.1} parent=43 // pred_fallthru
          _
        // Predicated region
        $region77: #{text_encoder_forward.1} parent=43 // pred_check
          %p758 = pneg %p342
        $region78: #{text_encoder_forward.1} parent=43 // pred_check_branch
          %760 = sbr.rel (%p758) target = $region80
        $region79: #{text_encoder_forward.1} parent=43 // pred_region
          %s761 = sand.u32 %s30, 1
          %s762 = scalar_lea.sflag [#allocation4], %s761
          %s763 = sand.u32 %s332, 1
          %s764 = smul.addr %s763, 16
          %s765 = scalar_lea.vmem [#allocation19], %s764
          %s767 = ssub.s32 256, 256
          %768 = vsyncadd %s762, %s767
          %s769 = smul.addr %s30, 4
          %s770 = smul.addr %s769, 64
          %s771 = scalar_lea.hbm %s12, %s770
          %s772 = sshll.u32 %s765, 4
          %s773 = int_to_ptr.vmem [resolvable:$true] %s772
          %778 = dma.hbm_to_vmem [thread:$0]  %s771, 256, %s773, %s762, 64, 64, 4
        $region80: #{text_encoder_forward.1} parent=43 // pred_fallthru
          _
        // Predicated region
        $region81: #{text_encoder_forward.1} parent=43 // pred_check
          %p779 = pneg %p368
        $region82: #{text_encoder_forward.1} parent=43 // pred_check_branch
          %781 = sbr.rel (%p779) target = $region84
        $region83: #{text_encoder_forward.1} parent=43 // pred_region
          %s782 = sand.u32 %s30, 1
          %s783 = scalar_lea.sflag [#allocation4], %s782
          %s784 = sand.u32 %s358, 1
          %s785 = scalar_lea.vmem [#allocation20], %s784
          %s787 = ssub.s32 16, 16
          %788 = vsyncadd %s783, %s787
          %s789 = smul.addr %s30, 16
          %s790 = scalar_lea.hbm %s13, %s789
          %s792 = sshll.u32 %s785, 4
          %s793 = int_to_ptr.vmem [resolvable:$true] %s792
          %795 = dma.hbm_to_vmem [thread:$0]  %s790, 16, %s793, %s783
        $region84: #{text_encoder_forward.1} parent=43 // pred_fallthru
          _
        // Predicated region
        $region85: #{text_encoder_forward.1} parent=43 // pred_check
          %p796 = pneg %p394
        $region86: #{text_encoder_forward.1} parent=43 // pred_check_branch
          %798 = sbr.rel (%p796) target = $region88
        $region87: #{text_encoder_forward.1} parent=43 // pred_region
          %s799 = sand.u32 %s30, 1
          %s800 = scalar_lea.sflag [#allocation4], %s799
          %s801 = sand.u32 %s384, 1
          %s802 = smul.addr %s801, 64
          %s803 = scalar_lea.vmem [#allocation21], %s802
          %s805 = ssub.s32 1024, 1024
          %806 = vsyncadd %s800, %s805
          %s807 = smul.addr %s30, 16
          %s808 = smul.addr %s807, 64
          %s809 = scalar_lea.hbm %s14, %s808
          %s810 = sshll.u32 %s803, 4
          %s811 = int_to_ptr.vmem [resolvable:$true] %s810
          %816 = dma.hbm_to_vmem [thread:$0]  %s809, 1024, %s811, %s800, 64, 64, 4
        $region88: #{text_encoder_forward.1} parent=43 // pred_fallthru
          _
        // Predicated region
        $region89: #{text_encoder_forward.1} parent=43 // pred_check
          %p817 = pneg %p420
        $region90: #{text_encoder_forward.1} parent=43 // pred_check_branch
          %819 = sbr.rel (%p817) target = $region92
        $region91: #{text_encoder_forward.1} parent=43 // pred_region
          %s820 = sand.u32 %s30, 1
          %s821 = scalar_lea.sflag [#allocation4], %s820
          %s822 = sand.u32 %s410, 1
          %s823 = scalar_lea.vmem [#allocation22], %s822
          %s825 = ssub.s32 16, 16
          %826 = vsyncadd %s821, %s825
          %s827 = smul.addr %s30, 16
          %s828 = scalar_lea.hbm %s15, %s827
          %s830 = sshll.u32 %s823, 4
          %s831 = int_to_ptr.vmem [resolvable:$true] %s830
          %833 = dma.hbm_to_vmem [thread:$0]  %s828, 16, %s831, %s821
        $region92: #{text_encoder_forward.1} parent=43 // pred_fallthru
          _
      $region44: #{text_encoder_forward.1} parent=5 // pred_fallthru
        _
      %p834 = scmp.le.s32.totalorder 1, %s30
      %p835 = scmp.lt.s32.totalorder %s30, 3
      %p836 = pnand %p834, %p835
      %p837 = pneg %p836
      // Predicated region
      $region93: #{text_encoder_forward.1} parent=5 // pred_check
        _
      $region94: #{text_encoder_forward.1} parent=5 // pred_check_branch
        %839 = sbr.rel (%p836) target = $region96
      $region95: #{text_encoder_forward.1} parent=5 // pred_region
        %s840 = ssub.s32 %s30, 1
        // Predicated region
        $region97: #{text_encoder_forward.1} parent=95 // pred_check
          %p841 = pneg %p51
        $region98: #{text_encoder_forward.1} parent=95 // pred_check_branch
          %843 = sbr.rel (%p841) target = $region100
        $region99: #{text_encoder_forward.1} parent=95 // pred_region
          %844 = dma.done [#allocation4], 512
        $region100: #{text_encoder_forward.1} parent=95 // pred_fallthru
          _
        // Predicated region
        $region101: #{text_encoder_forward.1} parent=95 // pred_check
          %p845 = pneg %p72
        $region102: #{text_encoder_forward.1} parent=95 // pred_check_branch
          %847 = sbr.rel (%p845) target = $region104
        $region103: #{text_encoder_forward.1} parent=95 // pred_region
          %848 = dma.done [#allocation7], 64
        $region104: #{text_encoder_forward.1} parent=95 // pred_fallthru
          _
        // Predicated region
        $region105: #{text_encoder_forward.1} parent=95 // pred_check
          %p849 = pneg %p93
        $region106: #{text_encoder_forward.1} parent=95 // pred_check_branch
          %851 = sbr.rel (%p849) target = $region108
        $region107: #{text_encoder_forward.1} parent=95 // pred_region
          %852 = dma.done [#allocation7], 2048
        $region108: #{text_encoder_forward.1} parent=95 // pred_fallthru
          _
        // Predicated region
        $region109: #{text_encoder_forward.1} parent=95 // pred_check
          %p853 = pneg %p114
        $region110: #{text_encoder_forward.1} parent=95 // pred_check_branch
          %855 = sbr.rel (%p853) target = $region112
        $region111: #{text_encoder_forward.1} parent=95 // pred_region
          %856 = dma.done [#allocation10], 2048
        $region112: #{text_encoder_forward.1} parent=95 // pred_fallthru
          _
        %s857 = sand.u32 %s35, 1
        %s858 = scalar_lea.sflag [#allocation4], %s857
        %s859 = sand.u32 %s127, 1
        %s860 = scalar_lea.vmem [#allocation11], %s859
        // Predicated region
        $region113: #{text_encoder_forward.1} parent=95 // pred_check
          %p861 = pneg %p140
        $region114: #{text_encoder_forward.1} parent=95 // pred_check_branch
          %863 = sbr.rel (%p861) target = $region116
        $region115: #{text_encoder_forward.1} parent=95 // pred_region
          %864 = dma.done %s858, 16
        $region116: #{text_encoder_forward.1} parent=95 // pred_fallthru
          _
        %s865 = sand.u32 %s35, 1
        %s866 = scalar_lea.sflag [#allocation4], %s865
        %s867 = sand.u32 %s153, 1
        %s868 = scalar_lea.vmem [#allocation12], %s867
        // Predicated region
        $region117: #{text_encoder_forward.1} parent=95 // pred_check
          %p869 = pneg %p166
        $region118: #{text_encoder_forward.1} parent=95 // pred_check_branch
          %871 = sbr.rel (%p869) target = $region120
        $region119: #{text_encoder_forward.1} parent=95 // pred_region
          %872 = dma.done %s866, 16
        $region120: #{text_encoder_forward.1} parent=95 // pred_fallthru
          _
        %s873 = sand.u32 %s35, 1
        %s874 = scalar_lea.sflag [#allocation4], %s873
        %s875 = sand.u32 %s179, 1
        %s876 = smul.addr %s875, 16
        %s877 = scalar_lea.vmem [#allocation13], %s876
        // Predicated region
        $region121: #{text_encoder_forward.1} parent=95 // pred_check
          %p878 = pneg %p192
        $region122: #{text_encoder_forward.1} parent=95 // pred_check_branch
          %880 = sbr.rel (%p878) target = $region124
        $region123: #{text_encoder_forward.1} parent=95 // pred_region
          %881 = dma.done %s874, 256
        $region124: #{text_encoder_forward.1} parent=95 // pred_fallthru
          _
        %s882 = sand.u32 %s35, 1
        %s883 = scalar_lea.sflag [#allocation4], %s882
        %s884 = sand.u32 %s205, 1
        %s885 = scalar_lea.vmem [#allocation14], %s884
        // Predicated region
        $region125: #{text_encoder_forward.1} parent=95 // pred_check
          %p886 = pneg %p218
        $region126: #{text_encoder_forward.1} parent=95 // pred_check_branch
          %888 = sbr.rel (%p886) target = $region128
        $region127: #{text_encoder_forward.1} parent=95 // pred_region
          %889 = dma.done %s883, 16
        $region128: #{text_encoder_forward.1} parent=95 // pred_fallthru
          _
        %s890 = sand.u32 %s35, 1
        %s891 = scalar_lea.sflag [#allocation4], %s890
        %s892 = sand.u32 %s231, 1
        %s893 = smul.addr %s892, 16
        %s894 = scalar_lea.vmem [#allocation15], %s893
        // Predicated region
        $region129: #{text_encoder_forward.1} parent=95 // pred_check
          %p895 = pneg %p244
        $region130: #{text_encoder_forward.1} parent=95 // pred_check_branch
          %897 = sbr.rel (%p895) target = $region132
        $region131: #{text_encoder_forward.1} parent=95 // pred_region
          %898 = dma.done %s891, 256
        $region132: #{text_encoder_forward.1} parent=95 // pred_fallthru
          _
        %s899 = sand.u32 %s35, 1
        %s900 = scalar_lea.sflag [#allocation4], %s899
        %s901 = sand.u32 %s257, 1
        %s902 = scalar_lea.vmem [#allocation16], %s901
        // Predicated region
        $region133: #{text_encoder_forward.1} parent=95 // pred_check
          %p903 = pneg %p270
        $region134: #{text_encoder_forward.1} parent=95 // pred_check_branch
          %905 = sbr.rel (%p903) target = $region136
        $region135: #{text_encoder_forward.1} parent=95 // pred_region
          %906 = dma.done %s900, 16
        $region136: #{text_encoder_forward.1} parent=95 // pred_fallthru
          _
        %s907 = sand.u32 %s35, 1
        %s908 = scalar_lea.sflag [#allocation4], %s907
        %s909 = sand.u32 %s283, 1
        %s910 = scalar_lea.vmem [#allocation17], %s909
        // Predicated region
        $region137: #{text_encoder_forward.1} parent=95 // pred_check
          %p911 = pneg %p296
        $region138: #{text_encoder_forward.1} parent=95 // pred_check_branch
          %913 = sbr.rel (%p911) target = $region140
        $region139: #{text_encoder_forward.1} parent=95 // pred_region
          %914 = dma.done %s908, 16
        $region140: #{text_encoder_forward.1} parent=95 // pred_fallthru
          _
        %s915 = sand.u32 %s35, 1
        %s916 = scalar_lea.sflag [#allocation4], %s915
        %s917 = sand.u32 %s309, 1
        %s918 = scalar_lea.vmem [#allocation18], %s917
        // Predicated region
        $region141: #{text_encoder_forward.1} parent=95 // pred_check
          %p919 = pneg %p322
        $region142: #{text_encoder_forward.1} parent=95 // pred_check_branch
          %921 = sbr.rel (%p919) target = $region144
        $region143: #{text_encoder_forward.1} parent=95 // pred_region
          %922 = dma.done %s916, 16
        $region144: #{text_encoder_forward.1} parent=95 // pred_fallthru
          _
        %s923 = sand.u32 %s35, 1
        %s924 = scalar_lea.sflag [#allocation4], %s923
        %s925 = sand.u32 %s335, 1
        %s926 = smul.addr %s925, 16
        %s927 = scalar_lea.vmem [#allocation19], %s926
        // Predicated region
        $region145: #{text_encoder_forward.1} parent=95 // pred_check
          %p928 = pneg %p348
        $region146: #{text_encoder_forward.1} parent=95 // pred_check_branch
          %930 = sbr.rel (%p928) target = $region148
        $region147: #{text_encoder_forward.1} parent=95 // pred_region
          %931 = dma.done %s924, 256
        $region148: #{text_encoder_forward.1} parent=95 // pred_fallthru
          _
        %s932 = sand.u32 %s35, 1
        %s933 = scalar_lea.sflag [#allocation4], %s932
        %s934 = sand.u32 %s361, 1
        %s935 = scalar_lea.vmem [#allocation20], %s934
        // Predicated region
        $region149: #{text_encoder_forward.1} parent=95 // pred_check
          %p936 = pneg %p374
        $region150: #{text_encoder_forward.1} parent=95 // pred_check_branch
          %938 = sbr.rel (%p936) target = $region152
        $region151: #{text_encoder_forward.1} parent=95 // pred_region
          %939 = dma.done %s933, 16
        $region152: #{text_encoder_forward.1} parent=95 // pred_fallthru
          _
        %s940 = sand.u32 %s35, 1
        %s941 = scalar_lea.sflag [#allocation4], %s940
        %s942 = sand.u32 %s387, 1
        %s943 = smul.addr %s942, 64
        %s944 = scalar_lea.vmem [#allocation21], %s943
        // Predicated region
        $region153: #{text_encoder_forward.1} parent=95 // pred_check
          %p945 = pneg %p400
        $region154: #{text_encoder_forward.1} parent=95 // pred_check_branch
          %947 = sbr.rel (%p945) target = $region156
        $region155: #{text_encoder_forward.1} parent=95 // pred_region
          %948 = dma.done %s941, 1024
        $region156: #{text_encoder_forward.1} parent=95 // pred_fallthru
          _
        %s949 = sand.u32 %s35, 1
        %s950 = scalar_lea.sflag [#allocation4], %s949
        %s951 = sand.u32 %s413, 1
        %s952 = scalar_lea.vmem [#allocation22], %s951
        // Predicated region
        $region157: #{text_encoder_forward.1} parent=95 // pred_check
          %p953 = pneg %p426
        $region158: #{text_encoder_forward.1} parent=95 // pred_check_branch
          %955 = sbr.rel (%p953) target = $region160
        $region159: #{text_encoder_forward.1} parent=95 // pred_region
          %956 = dma.done %s950, 16
        $region160: #{text_encoder_forward.1} parent=95 // pred_fallthru
          _
        // Predicated region
        $region161: #{text_encoder_forward.1} parent=95 // pred_check
          %p957 = pneg %p447
        $region162: #{text_encoder_forward.1} parent=95 // pred_check_branch
          %959 = sbr.rel (%p957) target = $region164
        $region163: #{text_encoder_forward.1} parent=95 // pred_region
          %960 = dma.done [#allocation7], 16
        $region164: #{text_encoder_forward.1} parent=95 // pred_fallthru
          _
        // Predicated region
        $region165: #{text_encoder_forward.1} parent=95 // pred_check
          %p961 = pneg %p468
        $region166: #{text_encoder_forward.1} parent=95 // pred_check_branch
          %963 = sbr.rel (%p961) target = $region168
        $region167: #{text_encoder_forward.1} parent=95 // pred_region
          %964 = dma.done [#allocation10], 16
        $region168: #{text_encoder_forward.1} parent=95 // pred_fallthru
          _
        // Predicated region
        $region169: #{text_encoder_forward.1} parent=95 // pred_check
          %p965 = pneg %p489
        $region170: #{text_encoder_forward.1} parent=95 // pred_check_branch
          %967 = sbr.rel (%p965) target = $region172
        $region171: #{text_encoder_forward.1} parent=95 // pred_region
          %968 = dma.done [#allocation26], 256
        $region172: #{text_encoder_forward.1} parent=95 // pred_fallthru
          _
        %p969 = pneg %p51
        %p970 = pneg %p48
        %p971 = pneg %p72
        %p972 = pneg %p69
        %p973 = pneg %p93
        %p974 = pneg %p90
        %p975 = pneg %p114
        %p976 = pneg %p111
        %s977 = sand.u32 %s35, 1
        %s978 = scalar_lea.sflag [#allocation4], %s977
        %s979 = sand.u32 %s127, 1
        %s980 = scalar_lea.vmem [#allocation11], %s979
        %p981 = pneg %p140
        %p982 = pneg %p137
        %s983 = sand.u32 %s35, 1
        %s984 = scalar_lea.sflag [#allocation4], %s983
        %s985 = sand.u32 %s153, 1
        %s986 = scalar_lea.vmem [#allocation12], %s985
        %p987 = pneg %p166
        %p988 = pneg %p163
        %s989 = sand.u32 %s35, 1
        %s990 = scalar_lea.sflag [#allocation4], %s989
        %s991 = sand.u32 %s179, 1
        %s992 = smul.addr %s991, 16
        %s993 = scalar_lea.vmem [#allocation13], %s992
        %p994 = pneg %p192
        %p995 = pneg %p189
        %s996 = sand.u32 %s35, 1
        %s997 = scalar_lea.sflag [#allocation4], %s996
        %s998 = sand.u32 %s205, 1
        %s999 = scalar_lea.vmem [#allocation14], %s998
        %p1000 = pneg %p218
        %p1001 = pneg %p215
        %s1002 = sand.u32 %s35, 1
        %s1003 = scalar_lea.sflag [#allocation4], %s1002
        %s1004 = sand.u32 %s231, 1
        %s1005 = smul.addr %s1004, 16
        %s1006 = scalar_lea.vmem [#allocation15], %s1005
        %p1007 = pneg %p244
        %p1008 = pneg %p241
        %s1009 = sand.u32 %s35, 1
        %s1010 = scalar_lea.sflag [#allocation4], %s1009
        %s1011 = sand.u32 %s257, 1
        %s1012 = scalar_lea.vmem [#allocation16], %s1011
        %p1013 = pneg %p270
        %p1014 = pneg %p267
        %s1015 = sand.u32 %s35, 1
        %s1016 = scalar_lea.sflag [#allocation4], %s1015
        %s1017 = sand.u32 %s283, 1
        %s1018 = scalar_lea.vmem [#allocation17], %s1017
        %p1019 = pneg %p296
        %p1020 = pneg %p293
        %s1021 = sand.u32 %s35, 1
        %s1022 = scalar_lea.sflag [#allocation4], %s1021
        %s1023 = sand.u32 %s309, 1
        %s1024 = scalar_lea.vmem [#allocation18], %s1023
        %p1025 = pneg %p322
        %p1026 = pneg %p319
        %s1027 = sand.u32 %s35, 1
        %s1028 = scalar_lea.sflag [#allocation4], %s1027
        %s1029 = sand.u32 %s335, 1
        %s1030 = smul.addr %s1029, 16
        %s1031 = scalar_lea.vmem [#allocation19], %s1030
        %p1032 = pneg %p348
        %p1033 = pneg %p345
        %s1034 = sand.u32 %s35, 1
        %s1035 = scalar_lea.sflag [#allocation4], %s1034
        %s1036 = sand.u32 %s361, 1
        %s1037 = scalar_lea.vmem [#allocation20], %s1036
        %p1038 = pneg %p374
        %p1039 = pneg %p371
        %s1040 = sand.u32 %s35, 1
        %s1041 = scalar_lea.sflag [#allocation4], %s1040
        %s1042 = sand.u32 %s387, 1
        %s1043 = smul.addr %s1042, 64
        %s1044 = scalar_lea.vmem [#allocation21], %s1043
        %p1045 = pneg %p400
        %p1046 = pneg %p397
        %s1047 = sand.u32 %s35, 1
        %s1048 = scalar_lea.sflag [#allocation4], %s1047
        %s1049 = sand.u32 %s413, 1
        %s1050 = scalar_lea.vmem [#allocation22], %s1049
        %p1051 = pneg %p426
        %p1052 = pneg %p423
        %p1053 = pneg %p447
        %p1054 = pneg %p444
        %p1055 = pneg %p468
        %p1056 = pneg %p465
        %p1057 = pneg %p489
        %p1058 = pneg %p486
        %p1059 = pneg %p510
        %p1060 = pneg %p507
        %p1062 = scmp.eq.s32.totalorder %s35, 0
        // Predicated region
        $region173: #{text_encoder_forward.1} parent=95 // pred_check
          %p1063 = pneg %p1062
        $region174: #{text_encoder_forward.1} parent=95 // pred_check_branch
          %1065 = sbr.rel (%p1063) target = $region176
        $region175: #{text_encoder_forward.1} parent=95 // pred_region
          %v1066 = vld [vmem:[#allocation3] sm:$0xff]
          %v1067 = vld [vmem:[#allocation3 + $0x8] sm:$0xff]
          %v1068 = vld [vmem:[#allocation3 + $0x10] sm:$0xff]
          %v1069 = vld [vmem:[#allocation3 + $0x18] sm:$0xff]
          %vm1070 = vcmask 261120
          %1071 = vst.msk [vmem:[#allocation2] sm:$0xff] %vm1070, %v1066
          %1072 = vst.msk [vmem:[#allocation2 + $0x8] sm:$0xff] %vm1070, %v1067
          %1073 = vst.msk [vmem:[#allocation2 + $0x10] sm:$0xff] %vm1070, %v1068
          %1074 = vst.msk [vmem:[#allocation2 + $0x18] sm:$0xff] %vm1070, %v1069
        $region176: #{text_encoder_forward.1} parent=95 // pred_fallthru
          _
        %v1075 = vld [vmem:[#allocation2] sm:$0xff]
        %v1076 = vld [vmem:[#allocation2 + $0x8] sm:$0xff]
        %v1077 = vld [vmem:[#allocation2 + $0x10] sm:$0xff]
        %v1078 = vld [vmem:[#allocation2 + $0x18] sm:$0xff]
        %v1079 = vld [vmem:[#allocation9] sm:$0xff]
        %v1080 = vld [vmem:[#allocation9 + $0x8] sm:$0xff]
        %v1081 = vld [vmem:[#allocation9 + $0x10] sm:$0xff]
        %v1082 = vld [vmem:[#allocation9 + $0x18] sm:$0xff]
        %v1083 = vld [vmem:[#allocation9 + $0x20] sm:$0xff]
        %v1084 = vld [vmem:[#allocation9 + $0x28] sm:$0xff]
        %v1085 = vld [vmem:[#allocation9 + $0x30] sm:$0xff]
        %v1086 = vld [vmem:[#allocation9 + $0x38] sm:$0xff]
        %v1087 = vld [vmem:[#allocation9 + $0x40] sm:$0xff]
        %v1088 = vld [vmem:[#allocation9 + $0x48] sm:$0xff]
        %v1089 = vld [vmem:[#allocation9 + $0x50] sm:$0xff]
        %v1090 = vld [vmem:[#allocation9 + $0x58] sm:$0xff]
        %v1091 = vld [vmem:[#allocation9 + $0x60] sm:$0xff]
        %v1092 = vld [vmem:[#allocation9 + $0x68] sm:$0xff]
        %v1093 = vld [vmem:[#allocation9 + $0x70] sm:$0xff]
        %v1094 = vld [vmem:[#allocation9 + $0x78] sm:$0xff]
        %v1095 = vld [vmem:[%s860] sm:$0x1]
        %v1096 = vld [vmem:[%s868] sm:$0x1]
        %vm1097 = vcmask 261120
        %v1098 = vsel %vm1097, %v1075, 0.0
        %1099 = vadd.xlane.f32.xlu0 %v1098
        %v1100 = vpop.xlane.xlu0 %1099
        %v1101 = vsel %vm1097, %v1076, 0.0
        %1102 = vadd.xlane.f32.xlu0 %v1101
        %v1103 = vpop.xlane.xlu0 %1102
        %v1104 = vsel %vm1097, %v1077, 0.0
        %1105 = vadd.xlane.f32.xlu0 %v1104
        %v1106 = vpop.xlane.xlu0 %1105
        %v1107 = vsel %vm1097, %v1078, 0.0
        %1108 = vadd.xlane.f32.xlu0 %v1107
        %v1109 = vpop.xlane.xlu0 %1108
        %v1110 = vrcp.pop 32.0
        %v1111 = vmul.f32 %v1100, %v1110
        %v1112 = vmul.f32 %v1103, %v1110
        %v1113 = vmul.f32 %v1106, %v1110
        %v1114 = vmul.f32 %v1109, %v1110
        %v1115 = vsub.f32 %v1075, %v1111
        %v1116 = vsub.f32 %v1076, %v1112
        %v1117 = vsub.f32 %v1077, %v1113
        %v1118 = vsub.f32 %v1078, %v1114
        %v1119 = vmul.f32 %v1115, %v1115
        %v1120 = vmul.f32 %v1116, %v1116
        %v1121 = vmul.f32 %v1117, %v1117
        %v1122 = vmul.f32 %v1118, %v1118
        %v1123 = vsel %vm1097, %v1119, 0.0
        %1124 = vadd.xlane.f32.xlu0 %v1123
        %v1125 = vpop.xlane.xlu0 %1124
        %v1126 = vsel %vm1097, %v1120, 0.0
        %1127 = vadd.xlane.f32.xlu0 %v1126
        %v1128 = vpop.xlane.xlu0 %1127
        %v1129 = vsel %vm1097, %v1121, 0.0
        %1130 = vadd.xlane.f32.xlu0 %v1129
        %v1131 = vpop.xlane.xlu0 %1130
        %v1132 = vsel %vm1097, %v1122, 0.0
        %1133 = vadd.xlane.f32.xlu0 %v1132
        %v1134 = vpop.xlane.xlu0 %1133
        %v1135 = vmul.f32 %v1125, %v1110
        %v1136 = vmul.f32 %v1128, %v1110
        %v1137 = vmul.f32 %v1131, %v1110
        %v1138 = vmul.f32 %v1134, %v1110
        %v1139 = vadd.f32 %v1135, 1e-05
        %v1140 = vadd.f32 %v1136, 1e-05
        %v1141 = vadd.f32 %v1137, 1e-05
        %v1142 = vadd.f32 %v1138, 1e-05
        %v1143 = vrsqrt.pop %v1139
        %v1144 = vrsqrt.pop %v1140
        %v1145 = vrsqrt.pop %v1141
        %v1146 = vrsqrt.pop %v1142
        %v1147 = vmul.f32 %v1115, %v1143
        %v1148 = vmul.f32 %v1116, %v1144
        %v1149 = vmul.f32 %v1117, %v1145
        %v1150 = vmul.f32 %v1118, %v1146
        %v1152 = vlaneseq
        %v1153 = vshrl.u32 %v1152, 7
        %v1154 = vsub.s32 0, %v1153
        %v1155 = vrot.slane %v1095, %v1154
        %v1157 = vmul.f32 %v1147, %v1155
        %v1158 = vmul.f32 %v1148, %v1155
        %v1159 = vmul.f32 %v1149, %v1155
        %v1160 = vmul.f32 %v1150, %v1155
        %v1162 = vlaneseq
        %v1163 = vshrl.u32 %v1162, 7
        %v1164 = vsub.s32 0, %v1163
        %v1165 = vrot.slane %v1096, %v1164
        %v1167 = vadd.f32 %v1157, %v1165
        %v1168 = vadd.f32 %v1158, %v1165
        %v1169 = vadd.f32 %v1159, %v1165
        %v1170 = vadd.f32 %v1160, %v1165
        %v1171 = vpack.c.bf16 %v1168, %v1167
        %v1172 = vpack.c.bf16 %v1170, %v1169
        %v1173 = vld [vmem:[%s877] sm:$0xf]
        %v1174 = vld [vmem:[%s877 + $0x4] sm:$0xf]
        %v1175 = vld [vmem:[%s877 + $0x8] sm:$0xf]
        %v1176 = vld [vmem:[%s877 + $0xc] sm:$0xf]
        %v1177 = vld [vmem:[%s885] sm:$0x1]
        %v1179 = vlaneseq
        %v1180 = vshrl.u32 %v1179, 7
        %v1181 = vsub.s32 0, %v1180
        %v1182 = vrot.slane %v1177, %v1181
        %v1188 = vunpack.c.l.b16 %v1173
        %v1189 = vunpack.c.l.b16 %v1174
        %v1190 = vunpack.c.l.b16 %v1175
        %v1191 = vunpack.c.l.b16 %v1176
        %v1192 = vpack.c.b16 %v1189, %v1188
        %v1193 = vpack.c.b16 %v1191, %v1190
        %v1197 = vsel %vm1097, %v1171, 0
        %v1200 = vsel %vm1097, %v1172, 0
        %1202 = vmatprep.subr.bf16.mxu0 0
        %1203 = vmatpush1.bf16.msra.mxu0 %v1192
        %1204 = vmatprep.subr.bf16.mxu0 0
        %1205 = vmatpush1.bf16.msra.mxu0 %v1193
        %1206 = vmatprep.subr.bf16.mxu0 0
        %1207 = vmatpush1.bf16.msra.mxu0 0
        %1208 = vmatprep.subr.bf16.mxu0 0
        %1209 = vmatpush1.bf16.msra.mxu0 0
        %1210 = vmatprep.subr.bf16.mxu0 0
        %1211 = vmatpush1.bf16.msra.mxu0 0
        %1212 = vmatprep.subr.bf16.mxu0 0
        %1213 = vmatpush1.bf16.msra.mxu0 0
        %1214 = vmatprep.subr.bf16.mxu0 0
        %1215 = vmatpush1.bf16.msra.mxu0 0
        %1216 = vmatprep.subr.bf16.mxu0 0
        %1217 = vmatpush1.bf16.msra.mxu0 0
        %1218 = vmatprep.subr.bf16.mxu0 0
        %1219 = vmatpush1.bf16.msra.mxu0 0
        %1220 = vmatprep.subr.bf16.mxu0 0
        %1221 = vmatpush1.bf16.msra.mxu0 0
        %1222 = vmatprep.subr.bf16.mxu0 0
        %1223 = vmatpush1.bf16.msra.mxu0 0
        %1224 = vmatprep.subr.bf16.mxu0 0
        %1225 = vmatpush1.bf16.msra.mxu0 0
        %1226 = vmatprep.subr.bf16.mxu0 0
        %1227 = vmatpush1.bf16.msra.mxu0 0
        %1228 = vmatprep.subr.bf16.mxu0 0
        %1229 = vmatpush1.bf16.msra.mxu0 0
        %1230 = vmatprep.subr.bf16.mxu0 0
        %1231 = vmatpush1.bf16.msra.mxu0 0
        %1232 = vmatprep.subr.bf16.mxu0 0
        %1233 = vmatpush1.bf16.msra.mxu0 0
        %1234 = vmatprep.mubr.bf16.mxu0 0
        %1235 = vmatmul.mubr.bf16.gmra.mrb[0].mxu0 %v1197
        %v1236 = vpop.f32.mrb[0].mxu0
        %v1237 = vadd.f32 %v1182, %v1236
        %v1238 = vpop.f32.mrb[0].mxu0
        %v1239 = vpop.f32.mrb[0].mxu0
        %v1240 = vadd.f32 %v1182, %v1239
        %v1241 = vpop.f32.mrb[0].mxu0
        %1242 = vmatprep.mubr.bf16.mxu0 0
        %1243 = vmatmul.mubr.bf16.gmra.mrb[0].mxu0 %v1200
        %v1244 = vpop.f32.mrb[0].mxu0
        %v1245 = vadd.f32 %v1182, %v1244
        %v1246 = vpop.f32.mrb[0].mxu0
        %v1247 = vpop.f32.mrb[0].mxu0
        %v1248 = vadd.f32 %v1182, %v1247
        %v1249 = vpop.f32.mrb[0].mxu0
        %1250 = vdwg.mxu0
        %v1251 = vpack.c.bf16 %v1240, %v1237
        %v1252 = vpack.c.bf16 %v1248, %v1245
        %v1253 = vmul.f32 %v1237, %v1079
        %v1254 = vmul.f32 %v1240, %v1080
        %v1255 = vmul.f32 %v1245, %v1081
        %v1256 = vmul.f32 %v1248, %v1082
        %v1257 = vmul.f32 %v1237, %v1083
        %v1258 = vmul.f32 %v1240, %v1084
        %v1259 = vmul.f32 %v1245, %v1085
        %v1260 = vmul.f32 %v1248, %v1086
        %v1261 = vmul.f32 %v1237, %v1087
        %v1262 = vmul.f32 %v1240, %v1088
        %v1263 = vmul.f32 %v1245, %v1089
        %v1264 = vmul.f32 %v1248, %v1090
        %v1265 = vmul.f32 %v1237, %v1091
        %v1266 = vmul.f32 %v1240, %v1092
        %v1267 = vmul.f32 %v1245, %v1093
        %v1268 = vmul.f32 %v1248, %v1094
        %v1269 = vpack.c.bf16 %v1254, %v1253
        %v1270 = vpack.c.bf16 %v1256, %v1255
        %v1271 = vpack.c.bf16 %v1258, %v1257
        %v1272 = vpack.c.bf16 %v1260, %v1259
        %v1273 = vpack.c.bf16 %v1262, %v1261
        %v1274 = vpack.c.bf16 %v1264, %v1263
        %v1275 = vpack.c.bf16 %v1266, %v1265
        %v1276 = vpack.c.bf16 %v1268, %v1267
        %v1277 = vld [vmem:[#allocation8] sm:$0xff]
        %v1278 = vld [vmem:[#allocation8 + $0x8] sm:$0xff]
        %v1279 = vld [vmem:[#allocation8 + $0x10] sm:$0xff]
        %v1280 = vld [vmem:[#allocation8 + $0x18] sm:$0xff]
        %v1281 = vld [vmem:[#allocation8 + $0x20] sm:$0xff]
        %v1282 = vld [vmem:[#allocation8 + $0x28] sm:$0xff]
        %v1283 = vld [vmem:[#allocation8 + $0x30] sm:$0xff]
        %v1284 = vld [vmem:[#allocation8 + $0x38] sm:$0xff]
        %v1285 = vld [vmem:[#allocation8 + $0x40] sm:$0xff]
        %v1286 = vld [vmem:[#allocation8 + $0x48] sm:$0xff]
        %v1287 = vld [vmem:[#allocation8 + $0x50] sm:$0xff]
        %v1288 = vld [vmem:[#allocation8 + $0x58] sm:$0xff]
        %v1289 = vld [vmem:[#allocation8 + $0x60] sm:$0xff]
        %v1290 = vld [vmem:[#allocation8 + $0x68] sm:$0xff]
        %v1291 = vld [vmem:[#allocation8 + $0x70] sm:$0xff]
        %v1292 = vld [vmem:[#allocation8 + $0x78] sm:$0xff]
        %1295 = vrot.lane.b32.xlu0 %v1251, 96
        %v1296 = vpop.permute.xlu0 %1295
        %1297 = vrot.lane.b32.xlu0 %v1252, 96
        %v1298 = vpop.permute.xlu0 %1297
        %v1300 = vsel %vm1097, %v1269, 0
        %v1303 = vsel %vm1097, %v1270, 0
        %v1306 = vsel %vm1097, %v1271, 0
        %v1309 = vsel %vm1097, %v1272, 0
        %v1312 = vsel %vm1097, %v1273, 0
        %v1315 = vsel %vm1097, %v1274, 0
        %v1318 = vsel %vm1097, %v1275, 0
        %v1321 = vsel %vm1097, %v1276, 0
        %v1324 = vsel %vm1097, %v1296, 0
        %v1327 = vsel %vm1097, %v1298, 0
        %1329 = vmatprep.subr.bf16.mxu0 0
        %1330 = vmatpush1.bf16.xpose.msra.mxu0 %v1324
        %1331 = vmatprep.subr.bf16.mxu0 0
        %1332 = vmatpush1.bf16.xpose.msra.mxu0 %v1327
        %1333 = vmatprep.subr.bf16.mxu0 0
        %1334 = vmatpush1.bf16.xpose.msra.mxu0 0
        %1335 = vmatprep.subr.bf16.mxu0 0
        %1336 = vmatpush1.bf16.xpose.msra.mxu0 0
        %1337 = vmatprep.subr.bf16.mxu0 0
        %1338 = vmatpush1.bf16.xpose.msra.mxu0 0
        %1339 = vmatprep.subr.bf16.mxu0 0
        %1340 = vmatpush1.bf16.xpose.msra.mxu0 0
        %1341 = vmatprep.subr.bf16.mxu0 0
        %1342 = vmatpush1.bf16.xpose.msra.mxu0 0
        %1343 = vmatprep.subr.bf16.mxu0 0
        %1344 = vmatpush1.bf16.xpose.msra.mxu0 0
        %1345 = vmatprep.subr.bf16.mxu0 0
        %1346 = vmatpush1.bf16.xpose.msra.mxu0 0
        %1347 = vmatprep.subr.bf16.mxu0 0
        %1348 = vmatpush1.bf16.xpose.msra.mxu0 0
        %1349 = vmatprep.subr.bf16.mxu0 0
        %1350 = vmatpush1.bf16.xpose.msra.mxu0 0
        %1351 = vmatprep.subr.bf16.mxu0 0
        %1352 = vmatpush1.bf16.xpose.msra.mxu0 0
        %1353 = vmatprep.subr.bf16.mxu0 0
        %1354 = vmatpush1.bf16.xpose.msra.mxu0 0
        %1355 = vmatprep.subr.bf16.mxu0 0
        %1356 = vmatpush1.bf16.xpose.msra.mxu0 0
        %1357 = vmatprep.subr.bf16.mxu0 0
        %1358 = vmatpush1.bf16.xpose.msra.mxu0 0
        %1359 = vmatprep.subr.bf16.mxu0 0
        %1360 = vmatpush1.bf16.xpose.msra.mxu0 0
        %1361 = vmatprep.mubr.bf16.mxu0 0
        %1362 = vmatmul.mubr.bf16.gmra.mrb[0].mxu0 %v1300
        %v1363 = vpop.f32.mrb[0].mxu0
        %v1364 = vadd.f32 %v1277, %v1363
        %v1365 = vpop.f32.mrb[0].mxu0
        %v1366 = vpop.f32.mrb[0].mxu0
        %v1367 = vadd.f32 %v1278, %v1366
        %v1368 = vpop.f32.mrb[0].mxu0
        %1369 = vmatprep.mubr.bf16.mxu0 0
        %1370 = vmatmul.mubr.bf16.gmra.mrb[0].mxu0 %v1303
        %v1371 = vpop.f32.mrb[0].mxu0
        %v1372 = vadd.f32 %v1279, %v1371
        %v1373 = vpop.f32.mrb[0].mxu0
        %v1374 = vpop.f32.mrb[0].mxu0
        %v1375 = vadd.f32 %v1280, %v1374
        %v1376 = vpop.f32.mrb[0].mxu0
        %1377 = vmatprep.mubr.bf16.mxu0 0
        %1378 = vmatmul.mubr.bf16.gmra.mrb[0].mxu0 %v1306
        %v1379 = vpop.f32.mrb[0].mxu0
        %v1380 = vadd.f32 %v1281, %v1379
        %v1381 = vpop.f32.mrb[0].mxu0
        %v1382 = vpop.f32.mrb[0].mxu0
        %v1383 = vadd.f32 %v1282, %v1382
        %v1384 = vpop.f32.mrb[0].mxu0
        %1385 = vmatprep.mubr.bf16.mxu0 0
        %1386 = vmatmul.mubr.bf16.gmra.mrb[0].mxu0 %v1309
        %v1387 = vpop.f32.mrb[0].mxu0
        %v1388 = vadd.f32 %v1283, %v1387
        %v1389 = vpop.f32.mrb[0].mxu0
        %v1390 = vpop.f32.mrb[0].mxu0
        %v1391 = vadd.f32 %v1284, %v1390
        %v1392 = vpop.f32.mrb[0].mxu0
        %1393 = vmatprep.mubr.bf16.mxu0 0
        %1394 = vmatmul.mubr.bf16.gmra.mrb[0].mxu0 %v1312
        %v1395 = vpop.f32.mrb[0].mxu0
        %v1396 = vadd.f32 %v1285, %v1395
        %v1397 = vpop.f32.mrb[0].mxu0
        %v1398 = vpop.f32.mrb[0].mxu0
        %v1399 = vadd.f32 %v1286, %v1398
        %v1400 = vpop.f32.mrb[0].mxu0
        %1401 = vmatprep.mubr.bf16.mxu0 0
        %1402 = vmatmul.mubr.bf16.gmra.mrb[0].mxu0 %v1315
        %v1403 = vpop.f32.mrb[0].mxu0
        %v1404 = vadd.f32 %v1287, %v1403
        %v1405 = vpop.f32.mrb[0].mxu0
        %v1406 = vpop.f32.mrb[0].mxu0
        %v1407 = vadd.f32 %v1288, %v1406
        %v1408 = vpop.f32.mrb[0].mxu0
        %1409 = vmatprep.mubr.bf16.mxu0 0
        %1410 = vmatmul.mubr.bf16.gmra.mrb[0].mxu0 %v1318
        %v1411 = vpop.f32.mrb[0].mxu0
        %v1412 = vadd.f32 %v1289, %v1411
        %v1413 = vpop.f32.mrb[0].mxu0
        %v1414 = vpop.f32.mrb[0].mxu0
        %v1415 = vadd.f32 %v1290, %v1414
        %v1416 = vpop.f32.mrb[0].mxu0
        %1417 = vmatprep.mubr.bf16.mxu0 0
        %1418 = vmatmul.mubr.bf16.gmra.mrb[0].mxu0 %v1321
        %v1419 = vpop.f32.mrb[0].mxu0
        %v1420 = vadd.f32 %v1291, %v1419
        %v1421 = vpop.f32.mrb[0].mxu0
        %v1422 = vpop.f32.mrb[0].mxu0
        %v1423 = vadd.f32 %v1292, %v1422
        %v1424 = vpop.f32.mrb[0].mxu0
        %1425 = vdwg.mxu0
        %v1426 = vsel %vm1097, %v1364, -inf
        %1427 = vmax.xlane.f32.xlu0 %v1426
        %v1428 = vpop.xlane.xlu0 %1427
        %v1429 = vsel %vm1097, %v1367, -inf
        %1430 = vmax.xlane.f32.xlu0 %v1429
        %v1431 = vpop.xlane.xlu0 %1430
        %v1432 = vsel %vm1097, %v1372, -inf
        %1433 = vmax.xlane.f32.xlu0 %v1432
        %v1434 = vpop.xlane.xlu0 %1433
        %v1435 = vsel %vm1097, %v1375, -inf
        %1436 = vmax.xlane.f32.xlu0 %v1435
        %v1437 = vpop.xlane.xlu0 %1436
        %v1438 = vsel %vm1097, %v1380, -inf
        %1439 = vmax.xlane.f32.xlu0 %v1438
        %v1440 = vpop.xlane.xlu0 %1439
        %v1441 = vsel %vm1097, %v1383, -inf
        %1442 = vmax.xlane.f32.xlu0 %v1441
        %v1443 = vpop.xlane.xlu0 %1442
        %v1444 = vsel %vm1097, %v1388, -inf
        %1445 = vmax.xlane.f32.xlu0 %v1444
        %v1446 = vpop.xlane.xlu0 %1445
        %v1447 = vsel %vm1097, %v1391, -inf
        %1448 = vmax.xlane.f32.xlu0 %v1447
        %v1449 = vpop.xlane.xlu0 %1448
        %v1450 = vsel %vm1097, %v1396, -inf
        %1451 = vmax.xlane.f32.xlu0 %v1450
        %v1452 = vpop.xlane.xlu0 %1451
        %v1453 = vsel %vm1097, %v1399, -inf
        %1454 = vmax.xlane.f32.xlu0 %v1453
        %v1455 = vpop.xlane.xlu0 %1454
        %v1456 = vsel %vm1097, %v1404, -inf
        %1457 = vmax.xlane.f32.xlu0 %v1456
        %v1458 = vpop.xlane.xlu0 %1457
        %v1459 = vsel %vm1097, %v1407, -inf
        %1460 = vmax.xlane.f32.xlu0 %v1459
        %v1461 = vpop.xlane.xlu0 %1460
        %v1462 = vsel %vm1097, %v1412, -inf
        %1463 = vmax.xlane.f32.xlu0 %v1462
        %v1464 = vpop.xlane.xlu0 %1463
        %v1465 = vsel %vm1097, %v1415, -inf
        %1466 = vmax.xlane.f32.xlu0 %v1465
        %v1467 = vpop.xlane.xlu0 %1466
        %v1468 = vsel %vm1097, %v1420, -inf
        %1469 = vmax.xlane.f32.xlu0 %v1468
        %v1470 = vpop.xlane.xlu0 %1469
        %v1471 = vsel %vm1097, %v1423, -inf
        %1472 = vmax.xlane.f32.xlu0 %v1471
        %v1473 = vpop.xlane.xlu0 %1472
        %v1474 = vsub.f32 %v1364, %v1428
        %v1475 = vsub.f32 %v1367, %v1431
        %v1476 = vsub.f32 %v1372, %v1434
        %v1477 = vsub.f32 %v1375, %v1437
        %v1478 = vsub.f32 %v1380, %v1440
        %v1479 = vsub.f32 %v1383, %v1443
        %v1480 = vsub.f32 %v1388, %v1446
        %v1481 = vsub.f32 %v1391, %v1449
        %v1482 = vsub.f32 %v1396, %v1452
        %v1483 = vsub.f32 %v1399, %v1455
        %v1484 = vsub.f32 %v1404, %v1458
        %v1485 = vsub.f32 %v1407, %v1461
        %v1486 = vsub.f32 %v1412, %v1464
        %v1487 = vsub.f32 %v1415, %v1467
        %v1488 = vsub.f32 %v1420, %v1470
        %v1489 = vsub.f32 %v1423, %v1473
        %v1490 = vmul.f32 %v1474, 1.442695
        %v1491 = vpow.pop %v1490
        %v1492 = vmul.f32 %v1475, 1.442695
        %v1493 = vpow.pop %v1492
        %v1494 = vmul.f32 %v1476, 1.442695
        %v1495 = vpow.pop %v1494
        %v1496 = vmul.f32 %v1477, 1.442695
        %v1497 = vpow.pop %v1496
        %v1498 = vmul.f32 %v1478, 1.442695
        %v1499 = vpow.pop %v1498
        %v1500 = vmul.f32 %v1479, 1.442695
        %v1501 = vpow.pop %v1500
        %v1502 = vmul.f32 %v1480, 1.442695
        %v1503 = vpow.pop %v1502
        %v1504 = vmul.f32 %v1481, 1.442695
        %v1505 = vpow.pop %v1504
        %v1506 = vmul.f32 %v1482, 1.442695
        %v1507 = vpow.pop %v1506
        %v1508 = vmul.f32 %v1483, 1.442695
        %v1509 = vpow.pop %v1508
        %v1510 = vmul.f32 %v1484, 1.442695
        %v1511 = vpow.pop %v1510
        %v1512 = vmul.f32 %v1485, 1.442695
        %v1513 = vpow.pop %v1512
        %v1514 = vmul.f32 %v1486, 1.442695
        %v1515 = vpow.pop %v1514
        %v1516 = vmul.f32 %v1487, 1.442695
        %v1517 = vpow.pop %v1516
        %v1518 = vmul.f32 %v1488, 1.442695
        %v1519 = vpow.pop %v1518
        %v1520 = vmul.f32 %v1489, 1.442695
        %v1521 = vpow.pop %v1520
        %v1522 = vsel %vm1097, %v1491, 0.0
        %1523 = vadd.xlane.f32.xlu0 %v1522
        %v1524 = vpop.xlane.xlu0 %1523
        %v1525 = vsel %vm1097, %v1493, 0.0
        %1526 = vadd.xlane.f32.xlu0 %v1525
        %v1527 = vpop.xlane.xlu0 %1526
        %v1528 = vsel %vm1097, %v1495, 0.0
        %1529 = vadd.xlane.f32.xlu0 %v1528
        %v1530 = vpop.xlane.xlu0 %1529
        %v1531 = vsel %vm1097, %v1497, 0.0
        %1532 = vadd.xlane.f32.xlu0 %v1531
        %v1533 = vpop.xlane.xlu0 %1532
        %v1534 = vsel %vm1097, %v1499, 0.0
        %1535 = vadd.xlane.f32.xlu0 %v1534
        %v1536 = vpop.xlane.xlu0 %1535
        %v1537 = vsel %vm1097, %v1501, 0.0
        %1538 = vadd.xlane.f32.xlu0 %v1537
        %v1539 = vpop.xlane.xlu0 %1538
        %v1540 = vsel %vm1097, %v1503, 0.0
        %1541 = vadd.xlane.f32.xlu0 %v1540
        %v1542 = vpop.xlane.xlu0 %1541
        %v1543 = vsel %vm1097, %v1505, 0.0
        %1544 = vadd.xlane.f32.xlu0 %v1543
        %v1545 = vpop.xlane.xlu0 %1544
        %v1546 = vsel %vm1097, %v1507, 0.0
        %1547 = vadd.xlane.f32.xlu0 %v1546
        %v1548 = vpop.xlane.xlu0 %1547
        %v1549 = vsel %vm1097, %v1509, 0.0
        %1550 = vadd.xlane.f32.xlu0 %v1549
        %v1551 = vpop.xlane.xlu0 %1550
        %v1552 = vsel %vm1097, %v1511, 0.0
        %1553 = vadd.xlane.f32.xlu0 %v1552
        %v1554 = vpop.xlane.xlu0 %1553
        %v1555 = vsel %vm1097, %v1513, 0.0
        %1556 = vadd.xlane.f32.xlu0 %v1555
        %v1557 = vpop.xlane.xlu0 %1556
        %v1558 = vsel %vm1097, %v1515, 0.0
        %1559 = vadd.xlane.f32.xlu0 %v1558
        %v1560 = vpop.xlane.xlu0 %1559
        %v1561 = vsel %vm1097, %v1517, 0.0
        %1562 = vadd.xlane.f32.xlu0 %v1561
        %v1563 = vpop.xlane.xlu0 %1562
        %v1564 = vsel %vm1097, %v1519, 0.0
        %1565 = vadd.xlane.f32.xlu0 %v1564
        %v1566 = vpop.xlane.xlu0 %1565
        %v1567 = vsel %vm1097, %v1521, 0.0
        %1568 = vadd.xlane.f32.xlu0 %v1567
        %v1569 = vpop.xlane.xlu0 %1568
        %v1570 = vrcp.pop %v1524
        %v1571 = vrcp.pop %v1527
        %v1572 = vrcp.pop %v1530
        %v1573 = vrcp.pop %v1533
        %v1574 = vrcp.pop %v1536
        %v1575 = vrcp.pop %v1539
        %v1576 = vrcp.pop %v1542
        %v1577 = vrcp.pop %v1545
        %v1578 = vrcp.pop %v1548
        %v1579 = vrcp.pop %v1551
        %v1580 = vrcp.pop %v1554
        %v1581 = vrcp.pop %v1557
        %v1582 = vrcp.pop %v1560
        %v1583 = vrcp.pop %v1563
        %v1584 = vrcp.pop %v1566
        %v1585 = vrcp.pop %v1569
        %v1586 = vmul.f32 %v1491, %v1570
        %v1587 = vmul.f32 %v1493, %v1571
        %v1588 = vmul.f32 %v1495, %v1572
        %v1589 = vmul.f32 %v1497, %v1573
        %v1590 = vmul.f32 %v1499, %v1574
        %v1591 = vmul.f32 %v1501, %v1575
        %v1592 = vmul.f32 %v1503, %v1576
        %v1593 = vmul.f32 %v1505, %v1577
        %v1594 = vmul.f32 %v1507, %v1578
        %v1595 = vmul.f32 %v1509, %v1579
        %v1596 = vmul.f32 %v1511, %v1580
        %v1597 = vmul.f32 %v1513, %v1581
        %v1598 = vmul.f32 %v1515, %v1582
        %v1599 = vmul.f32 %v1517, %v1583
        %v1600 = vmul.f32 %v1519, %v1584
        %v1601 = vmul.f32 %v1521, %v1585
        %v1602 = vpack.c.bf16 %v1587, %v1586
        %v1603 = vpack.c.bf16 %v1589, %v1588
        %v1604 = vpack.c.bf16 %v1591, %v1590
        %v1605 = vpack.c.bf16 %v1593, %v1592
        %v1606 = vpack.c.bf16 %v1595, %v1594
        %v1607 = vpack.c.bf16 %v1597, %v1596
        %v1608 = vpack.c.bf16 %v1599, %v1598
        %v1609 = vpack.c.bf16 %v1601, %v1600
        %1610 = vrot.lane.b32.xlu0 %v1251, 64
        %v1611 = vpop.permute.xlu0 %1610
        %1612 = vrot.lane.b32.xlu0 %v1252, 64
        %v1613 = vpop.permute.xlu0 %1612
        %v1617 = vsel %vm1097, %v1602, 0
        %v1620 = vsel %vm1097, %v1603, 0
        %v1623 = vsel %vm1097, %v1604, 0
        %v1626 = vsel %vm1097, %v1605, 0
        %v1629 = vsel %vm1097, %v1606, 0
        %v1632 = vsel %vm1097, %v1607, 0
        %v1635 = vsel %vm1097, %v1608, 0
        %v1638 = vsel %vm1097, %v1609, 0
        %1640 = vmatprep.subr.bf16.mxu0 0
        %1641 = vmatpush1.bf16.msra.mxu0 %v1611
        %1642 = vmatprep.subr.bf16.mxu0 0
        %1643 = vmatpush1.bf16.msra.mxu0 %v1613
        %1644 = vmatprep.subr.bf16.mxu0 0
        %1645 = vmatpush1.bf16.msra.mxu0 0
        %1646 = vmatprep.subr.bf16.mxu0 0
        %1647 = vmatpush1.bf16.msra.mxu0 0
        %1648 = vmatprep.subr.bf16.mxu0 0
        %1649 = vmatpush1.bf16.msra.mxu0 0
        %1650 = vmatprep.subr.bf16.mxu0 0
        %1651 = vmatpush1.bf16.msra.mxu0 0
        %1652 = vmatprep.subr.bf16.mxu0 0
        %1653 = vmatpush1.bf16.msra.mxu0 0
        %1654 = vmatprep.subr.bf16.mxu0 0
        %1655 = vmatpush1.bf16.msra.mxu0 0
        %1656 = vmatprep.subr.bf16.mxu0 0
        %1657 = vmatpush1.bf16.msra.mxu0 0
        %1658 = vmatprep.subr.bf16.mxu0 0
        %1659 = vmatpush1.bf16.msra.mxu0 0
        %1660 = vmatprep.subr.bf16.mxu0 0
        %1661 = vmatpush1.bf16.msra.mxu0 0
        %1662 = vmatprep.subr.bf16.mxu0 0
        %1663 = vmatpush1.bf16.msra.mxu0 0
        %1664 = vmatprep.subr.bf16.mxu0 0
        %1665 = vmatpush1.bf16.msra.mxu0 0
        %1666 = vmatprep.subr.bf16.mxu0 0
        %1667 = vmatpush1.bf16.msra.mxu0 0
        %1668 = vmatprep.subr.bf16.mxu0 0
        %1669 = vmatpush1.bf16.msra.mxu0 0
        %1670 = vmatprep.subr.bf16.mxu0 0
        %1671 = vmatpush1.bf16.msra.mxu0 0
        %1672 = vmatprep.mubr.bf16.mxu0 0
        %1673 = vmatmul.mubr.bf16.gmra.mrb[0].mxu0 %v1617
        %v1674 = vpop.f32.mrb[0].mxu0
        %v1675 = vadd.f32 0.0, %v1674
        %v1676 = vpop.f32.mrb[0].mxu0
        %v1677 = vpop.f32.mrb[0].mxu0
        %v1678 = vadd.f32 0.0, %v1677
        %v1679 = vpop.f32.mrb[0].mxu0
        %1680 = vmatprep.mubr.bf16.mxu0 0
        %1681 = vmatmul.mubr.bf16.gmra.mrb[0].mxu0 %v1620
        %v1682 = vpop.f32.mrb[0].mxu0
        %v1683 = vadd.f32 0.0, %v1682
        %v1684 = vpop.f32.mrb[0].mxu0
        %v1685 = vpop.f32.mrb[0].mxu0
        %v1686 = vadd.f32 0.0, %v1685
        %v1687 = vpop.f32.mrb[0].mxu0
        %1688 = vmatprep.mubr.bf16.mxu0 0
        %1689 = vmatmul.mubr.bf16.gmra.mrb[0].mxu0 %v1623
        %v1690 = vpop.f32.mrb[0].mxu0
        %v1691 = vadd.f32 0.0, %v1690
        %v1692 = vpop.f32.mrb[0].mxu0
        %v1693 = vpop.f32.mrb[0].mxu0
        %v1694 = vadd.f32 0.0, %v1693
        %v1695 = vpop.f32.mrb[0].mxu0
        %1696 = vmatprep.mubr.bf16.mxu0 0
        %1697 = vmatmul.mubr.bf16.gmra.mrb[0].mxu0 %v1626
        %v1698 = vpop.f32.mrb[0].mxu0
        %v1699 = vadd.f32 0.0, %v1698
        %v1700 = vpop.f32.mrb[0].mxu0
        %v1701 = vpop.f32.mrb[0].mxu0
        %v1702 = vadd.f32 0.0, %v1701
        %v1703 = vpop.f32.mrb[0].mxu0
        %1704 = vmatprep.mubr.bf16.mxu0 0
        %1705 = vmatmul.mubr.bf16.gmra.mrb[0].mxu0 %v1629
        %v1706 = vpop.f32.mrb[0].mxu0
        %v1707 = vadd.f32 0.0, %v1706
        %v1708 = vpop.f32.mrb[0].mxu0
        %v1709 = vpop.f32.mrb[0].mxu0
        %v1710 = vadd.f32 0.0, %v1709
        %v1711 = vpop.f32.mrb[0].mxu0
        %1712 = vmatprep.mubr.bf16.mxu0 0
        %1713 = vmatmul.mubr.bf16.gmra.mrb[0].mxu0 %v1632
        %v1714 = vpop.f32.mrb[0].mxu0
        %v1715 = vadd.f32 0.0, %v1714
        %v1716 = vpop.f32.mrb[0].mxu0
        %v1717 = vpop.f32.mrb[0].mxu0
        %v1718 = vadd.f32 0.0, %v1717
        %v1719 = vpop.f32.mrb[0].mxu0
        %1720 = vmatprep.mubr.bf16.mxu0 0
        %1721 = vmatmul.mubr.bf16.gmra.mrb[0].mxu0 %v1635
        %v1722 = vpop.f32.mrb[0].mxu0
        %v1723 = vadd.f32 0.0, %v1722
        %v1724 = vpop.f32.mrb[0].mxu0
        %v1725 = vpop.f32.mrb[0].mxu0
        %v1726 = vadd.f32 0.0, %v1725
        %v1727 = vpop.f32.mrb[0].mxu0
        %1728 = vmatprep.mubr.bf16.mxu0 0
        %1729 = vmatmul.mubr.bf16.gmra.mrb[0].mxu0 %v1638
        %v1730 = vpop.f32.mrb[0].mxu0
        %v1731 = vadd.f32 0.0, %v1730
        %v1732 = vpop.f32.mrb[0].mxu0
        %v1733 = vpop.f32.mrb[0].mxu0
        %v1734 = vadd.f32 0.0, %v1733
        %v1735 = vpop.f32.mrb[0].mxu0
        %1736 = vdwg.mxu0
        %v1737 = vmul.f32 %v1675, %v1079
        %v1738 = vmul.f32 %v1678, %v1080
        %v1739 = vmul.f32 %v1683, %v1081
        %v1740 = vmul.f32 %v1686, %v1082
        %v1741 = vmul.f32 %v1691, %v1083
        %v1742 = vmul.f32 %v1694, %v1084
        %v1743 = vmul.f32 %v1699, %v1085
        %v1744 = vmul.f32 %v1702, %v1086
        %v1745 = vmul.f32 %v1707, %v1087
        %v1746 = vmul.f32 %v1710, %v1088
        %v1747 = vmul.f32 %v1715, %v1089
        %v1748 = vmul.f32 %v1718, %v1090
        %v1749 = vmul.f32 %v1723, %v1091
        %v1750 = vmul.f32 %v1726, %v1092
        %v1751 = vmul.f32 %v1731, %v1093
        %v1752 = vmul.f32 %v1734, %v1094
        %v1753 = vadd.f32 %v1737, %v1741
        %v1754 = vadd.f32 %v1738, %v1742
        %v1755 = vadd.f32 %v1739, %v1743
        %v1756 = vadd.f32 %v1740, %v1744
        %v1757 = vadd.f32 %v1753, %v1745
        %v1758 = vadd.f32 %v1754, %v1746
        %v1759 = vadd.f32 %v1755, %v1747
        %v1760 = vadd.f32 %v1756, %v1748
        %v1761 = vadd.f32 %v1757, %v1749
        %v1762 = vadd.f32 %v1758, %v1750
        %v1763 = vadd.f32 %v1759, %v1751
        %v1764 = vadd.f32 %v1760, %v1752
        %v1765 = vpack.c.bf16 %v1762, %v1761
        %v1766 = vpack.c.bf16 %v1764, %v1763
        %v1767 = vld [vmem:[%s894] sm:$0xf]
        %v1768 = vld [vmem:[%s894 + $0x4] sm:$0xf]
        %v1769 = vld [vmem:[%s894 + $0x8] sm:$0xf]
        %v1770 = vld [vmem:[%s894 + $0xc] sm:$0xf]
        %v1771 = vld [vmem:[%s902] sm:$0x1]
        %v1773 = vlaneseq
        %v1774 = vshrl.u32 %v1773, 7
        %v1775 = vsub.s32 0, %v1774
        %v1776 = vrot.slane %v1771, %v1775
        %v1782 = vunpack.c.l.b16 %v1767
        %v1783 = vunpack.c.l.b16 %v1768
        %v1784 = vunpack.c.l.b16 %v1769
        %v1785 = vunpack.c.l.b16 %v1770
        %v1786 = vpack.c.b16 %v1783, %v1782
        %v1787 = vpack.c.b16 %v1785, %v1784
        %v1791 = vsel %vm1097, %v1765, 0
        %v1794 = vsel %vm1097, %v1766, 0
        %1796 = vmatprep.subr.bf16.mxu0 0
        %1797 = vmatpush1.bf16.msra.mxu0 %v1786
        %1798 = vmatprep.subr.bf16.mxu0 0
        %1799 = vmatpush1.bf16.msra.mxu0 %v1787
        %1800 = vmatprep.subr.bf16.mxu0 0
        %1801 = vmatpush1.bf16.msra.mxu0 0
        %1802 = vmatprep.subr.bf16.mxu0 0
        %1803 = vmatpush1.bf16.msra.mxu0 0
        %1804 = vmatprep.subr.bf16.mxu0 0
        %1805 = vmatpush1.bf16.msra.mxu0 0
        %1806 = vmatprep.subr.bf16.mxu0 0
        %1807 = vmatpush1.bf16.msra.mxu0 0
        %1808 = vmatprep.subr.bf16.mxu0 0
        %1809 = vmatpush1.bf16.msra.mxu0 0
        %1810 = vmatprep.subr.bf16.mxu0 0
        %1811 = vmatpush1.bf16.msra.mxu0 0
        %1812 = vmatprep.subr.bf16.mxu0 0
        %1813 = vmatpush1.bf16.msra.mxu0 0
        %1814 = vmatprep.subr.bf16.mxu0 0
        %1815 = vmatpush1.bf16.msra.mxu0 0
        %1816 = vmatprep.subr.bf16.mxu0 0
        %1817 = vmatpush1.bf16.msra.mxu0 0
        %1818 = vmatprep.subr.bf16.mxu0 0
        %1819 = vmatpush1.bf16.msra.mxu0 0
        %1820 = vmatprep.subr.bf16.mxu0 0
        %1821 = vmatpush1.bf16.msra.mxu0 0
        %1822 = vmatprep.subr.bf16.mxu0 0
        %1823 = vmatpush1.bf16.msra.mxu0 0
        %1824 = vmatprep.subr.bf16.mxu0 0
        %1825 = vmatpush1.bf16.msra.mxu0 0
        %1826 = vmatprep.subr.bf16.mxu0 0
        %1827 = vmatpush1.bf16.msra.mxu0 0
        %1828 = vmatprep.mubr.bf16.mxu0 0
        %1829 = vmatmul.mubr.bf16.gmra.mrb[0].mxu0 %v1791
        %v1830 = vpop.f32.mrb[0].mxu0
        %v1831 = vadd.f32 %v1776, %v1830
        %v1832 = vpop.f32.mrb[0].mxu0
        %v1833 = vpop.f32.mrb[0].mxu0
        %v1834 = vadd.f32 %v1776, %v1833
        %v1835 = vpop.f32.mrb[0].mxu0
        %1836 = vmatprep.mubr.bf16.mxu0 0
        %1837 = vmatmul.mubr.bf16.gmra.mrb[0].mxu0 %v1794
        %v1838 = vpop.f32.mrb[0].mxu0
        %v1839 = vadd.f32 %v1776, %v1838
        %v1840 = vpop.f32.mrb[0].mxu0
        %v1841 = vpop.f32.mrb[0].mxu0
        %v1842 = vadd.f32 %v1776, %v1841
        %v1843 = vpop.f32.mrb[0].mxu0
        %1844 = vdwg.mxu0
        %v1845 = vadd.f32 %v1075, %v1831
        %v1846 = vadd.f32 %v1076, %v1834
        %v1847 = vadd.f32 %v1077, %v1839
        %v1848 = vadd.f32 %v1078, %v1842
        %v1849 = vld [vmem:[%s910] sm:$0x1]
        %v1850 = vld [vmem:[%s918] sm:$0x1]
        %v1851 = vsel %vm1097, %v1845, 0.0
        %1852 = vadd.xlane.f32.xlu0 %v1851
        %v1853 = vpop.xlane.xlu0 %1852
        %v1854 = vsel %vm1097, %v1846, 0.0
        %1855 = vadd.xlane.f32.xlu0 %v1854
        %v1856 = vpop.xlane.xlu0 %1855
        %v1857 = vsel %vm1097, %v1847, 0.0
        %1858 = vadd.xlane.f32.xlu0 %v1857
        %v1859 = vpop.xlane.xlu0 %1858
        %v1860 = vsel %vm1097, %v1848, 0.0
        %1861 = vadd.xlane.f32.xlu0 %v1860
        %v1862 = vpop.xlane.xlu0 %1861
        %v1863 = vmul.f32 %v1853, %v1110
        %v1864 = vmul.f32 %v1856, %v1110
        %v1865 = vmul.f32 %v1859, %v1110
        %v1866 = vmul.f32 %v1862, %v1110
        %v1867 = vsub.f32 %v1845, %v1863
        %v1868 = vsub.f32 %v1846, %v1864
        %v1869 = vsub.f32 %v1847, %v1865
        %v1870 = vsub.f32 %v1848, %v1866
        %v1871 = vmul.f32 %v1867, %v1867
        %v1872 = vmul.f32 %v1868, %v1868
        %v1873 = vmul.f32 %v1869, %v1869
        %v1874 = vmul.f32 %v1870, %v1870
        %v1875 = vsel %vm1097, %v1871, 0.0
        %1876 = vadd.xlane.f32.xlu0 %v1875
        %v1877 = vpop.xlane.xlu0 %1876
        %v1878 = vsel %vm1097, %v1872, 0.0
        %1879 = vadd.xlane.f32.xlu0 %v1878
        %v1880 = vpop.xlane.xlu0 %1879
        %v1881 = vsel %vm1097, %v1873, 0.0
        %1882 = vadd.xlane.f32.xlu0 %v1881
        %v1883 = vpop.xlane.xlu0 %1882
        %v1884 = vsel %vm1097, %v1874, 0.0
        %1885 = vadd.xlane.f32.xlu0 %v1884
        %v1886 = vpop.xlane.xlu0 %1885
        %v1887 = vmul.f32 %v1877, %v1110
        %v1888 = vmul.f32 %v1880, %v1110
        %v1889 = vmul.f32 %v1883, %v1110
        %v1890 = vmul.f32 %v1886, %v1110
        %v1891 = vadd.f32 %v1887, 1e-05
        %v1892 = vadd.f32 %v1888, 1e-05
        %v1893 = vadd.f32 %v1889, 1e-05
        %v1894 = vadd.f32 %v1890, 1e-05
        %v1895 = vrsqrt.pop %v1891
        %v1896 = vrsqrt.pop %v1892
        %v1897 = vrsqrt.pop %v1893
        %v1898 = vrsqrt.pop %v1894
        %v1899 = vmul.f32 %v1867, %v1895
        %v1900 = vmul.f32 %v1868, %v1896
        %v1901 = vmul.f32 %v1869, %v1897
        %v1902 = vmul.f32 %v1870, %v1898
        %v1904 = vlaneseq
        %v1905 = vshrl.u32 %v1904, 7
        %v1906 = vsub.s32 0, %v1905
        %v1907 = vrot.slane %v1849, %v1906
        %v1909 = vmul.f32 %v1899, %v1907
        %v1910 = vmul.f32 %v1900, %v1907
        %v1911 = vmul.f32 %v1901, %v1907
        %v1912 = vmul.f32 %v1902, %v1907
        %v1914 = vlaneseq
        %v1915 = vshrl.u32 %v1914, 7
        %v1916 = vsub.s32 0, %v1915
        %v1917 = vrot.slane %v1850, %v1916
        %v1919 = vadd.f32 %v1909, %v1917
        %v1920 = vadd.f32 %v1910, %v1917
        %v1921 = vadd.f32 %v1911, %v1917
        %v1922 = vadd.f32 %v1912, %v1917
        %v1923 = vpack.c.bf16 %v1920, %v1919
        %v1924 = vpack.c.bf16 %v1922, %v1921
        %v1925 = vld [vmem:[%s927] sm:$0xf]
        %v1926 = vld [vmem:[%s927 + $0x4] sm:$0xf]
        %v1927 = vld [vmem:[%s927 + $0x8] sm:$0xf]
        %v1928 = vld [vmem:[%s927 + $0xc] sm:$0xf]
        %v1929 = vld [vmem:[%s935] sm:$0x1]
        %v1931 = vlaneseq
        %v1932 = vshrl.u32 %v1931, 7
        %v1933 = vsub.s32 0, %v1932
        %v1934 = vrot.slane %v1929, %v1933
        %v1940 = vunpack.c.l.b16 %v1925
        %v1941 = vunpack.c.l.b16 %v1926
        %v1942 = vunpack.c.l.b16 %v1927
        %v1943 = vunpack.c.l.b16 %v1928
        %v1944 = vpack.c.b16 %v1941, %v1940
        %v1945 = vpack.c.b16 %v1943, %v1942
        %v1949 = vsel %vm1097, %v1923, 0
        %v1952 = vsel %vm1097, %v1924, 0
        %1954 = vmatprep.subr.bf16.mxu0 0
        %1955 = vmatpush1.bf16.msra.mxu0 %v1944
        %1956 = vmatprep.subr.bf16.mxu0 0
        %1957 = vmatpush1.bf16.msra.mxu0 %v1945
        %1958 = vmatprep.subr.bf16.mxu0 0
        %1959 = vmatpush1.bf16.msra.mxu0 0
        %1960 = vmatprep.subr.bf16.mxu0 0
        %1961 = vmatpush1.bf16.msra.mxu0 0
        %1962 = vmatprep.subr.bf16.mxu0 0
        %1963 = vmatpush1.bf16.msra.mxu0 0
        %1964 = vmatprep.subr.bf16.mxu0 0
        %1965 = vmatpush1.bf16.msra.mxu0 0
        %1966 = vmatprep.subr.bf16.mxu0 0
        %1967 = vmatpush1.bf16.msra.mxu0 0
        %1968 = vmatprep.subr.bf16.mxu0 0
        %1969 = vmatpush1.bf16.msra.mxu0 0
        %1970 = vmatprep.subr.bf16.mxu0 0
        %1971 = vmatpush1.bf16.msra.mxu0 0
        %1972 = vmatprep.subr.bf16.mxu0 0
        %1973 = vmatpush1.bf16.msra.mxu0 0
        %1974 = vmatprep.subr.bf16.mxu0 0
        %1975 = vmatpush1.bf16.msra.mxu0 0
        %1976 = vmatprep.subr.bf16.mxu0 0
        %1977 = vmatpush1.bf16.msra.mxu0 0
        %1978 = vmatprep.subr.bf16.mxu0 0
        %1979 = vmatpush1.bf16.msra.mxu0 0
        %1980 = vmatprep.subr.bf16.mxu0 0
        %1981 = vmatpush1.bf16.msra.mxu0 0
        %1982 = vmatprep.subr.bf16.mxu0 0
        %1983 = vmatpush1.bf16.msra.mxu0 0
        %1984 = vmatprep.subr.bf16.mxu0 0
        %1985 = vmatpush1.bf16.msra.mxu0 0
        %1986 = vmatprep.mubr.bf16.mxu0 0
        %1987 = vmatmul.mubr.bf16.gmra.mrb[0].mxu0 %v1949
        %v1988 = vpop.f32.mrb[0].mxu0
        %v1989 = vadd.f32 %v1934, %v1988
        %v1990 = vpop.f32.mrb[0].mxu0
        %v1991 = vpop.f32.mrb[0].mxu0
        %v1992 = vadd.f32 %v1934, %v1991
        %v1993 = vpop.f32.mrb[0].mxu0
        %1994 = vmatprep.mubr.bf16.mxu0 0
        %1995 = vmatmul.mubr.bf16.gmra.mrb[0].mxu0 %v1952
        %v1996 = vpop.f32.mrb[0].mxu0
        %v1997 = vadd.f32 %v1934, %v1996
        %v1998 = vpop.f32.mrb[0].mxu0
        %v1999 = vpop.f32.mrb[0].mxu0
        %v2000 = vadd.f32 %v1934, %v1999
        %v2001 = vpop.f32.mrb[0].mxu0
        %2002 = vdwg.mxu0
        %v2003 = vmul.f32 %v1989, 1.702
        %v2004 = vmul.f32 %v1992, 1.702
        %v2005 = vmul.f32 %v1997, 1.702
        %v2006 = vmul.f32 %v2000, 1.702
        %v2007 = vxor.u32 %v2003, 2147483648
        %v2008 = vxor.u32 %v2004, 2147483648
        %v2009 = vxor.u32 %v2005, 2147483648
        %v2010 = vxor.u32 %v2006, 2147483648
        %v2011 = vmul.f32 %v2007, 1.442695
        %v2012 = vpow.pop %v2011
        %v2013 = vmul.f32 %v2008, 1.442695
        %v2014 = vpow.pop %v2013
        %v2015 = vmul.f32 %v2009, 1.442695
        %v2016 = vpow.pop %v2015
        %v2017 = vmul.f32 %v2010, 1.442695
        %v2018 = vpow.pop %v2017
        %v2019 = vadd.f32 %v2012, 1.0
        %v2020 = vadd.f32 %v2014, 1.0
        %v2021 = vadd.f32 %v2016, 1.0
        %v2022 = vadd.f32 %v2018, 1.0
        %v2023 = vrcp.pop %v2019
        %v2024 = vmul.f32 1.0, %v2023
        %v2025 = vrcp.pop %v2020
        %v2026 = vmul.f32 1.0, %v2025
        %v2027 = vrcp.pop %v2021
        %v2028 = vmul.f32 1.0, %v2027
        %v2029 = vrcp.pop %v2022
        %v2030 = vmul.f32 1.0, %v2029
        %v2031 = vmul.f32 %v1989, %v2024
        %v2032 = vmul.f32 %v1992, %v2026
        %v2033 = vmul.f32 %v1997, %v2028
        %v2034 = vmul.f32 %v2000, %v2030
        %v2035 = vpack.c.bf16 %v2032, %v2031
        %v2036 = vpack.c.bf16 %v2034, %v2033
        %v2037 = vld [vmem:[%s944] sm:$0xf]
        %v2038 = vld [vmem:[%s944 + $0x4] sm:$0xf]
        %v2039 = vld [vmem:[%s944 + $0x8] sm:$0xf]
        %v2040 = vld [vmem:[%s944 + $0xc] sm:$0xf]
        %v2041 = vld [vmem:[%s944 + $0x10] sm:$0xf]
        %v2042 = vld [vmem:[%s944 + $0x14] sm:$0xf]
        %v2043 = vld [vmem:[%s944 + $0x18] sm:$0xf]
        %v2044 = vld [vmem:[%s944 + $0x1c] sm:$0xf]
        %v2045 = vld [vmem:[%s944 + $0x20] sm:$0xf]
        %v2046 = vld [vmem:[%s944 + $0x24] sm:$0xf]
        %v2047 = vld [vmem:[%s944 + $0x28] sm:$0xf]
        %v2048 = vld [vmem:[%s944 + $0x2c] sm:$0xf]
        %v2049 = vld [vmem:[%s944 + $0x30] sm:$0xf]
        %v2050 = vld [vmem:[%s944 + $0x34] sm:$0xf]
        %v2051 = vld [vmem:[%s944 + $0x38] sm:$0xf]
        %v2052 = vld [vmem:[%s944 + $0x3c] sm:$0xf]
        %v2053 = vld [vmem:[%s952] sm:$0x1]
        %v2055 = vlaneseq
        %v2056 = vshrl.u32 %v2055, 7
        %v2057 = vsub.s32 0, %v2056
        %v2058 = vrot.slane %v2053, %v2057
        %v2076 = vunpack.c.l.b16 %v2037
        %v2077 = vunpack.c.l.b16 %v2038
        %v2078 = vunpack.c.l.b16 %v2039
        %v2079 = vunpack.c.l.b16 %v2040
        %v2080 = vunpack.c.l.b16 %v2041
        %v2081 = vunpack.c.l.b16 %v2042
        %v2082 = vunpack.c.l.b16 %v2043
        %v2083 = vunpack.c.l.b16 %v2044
        %v2084 = vunpack.c.l.b16 %v2045
        %v2085 = vunpack.c.l.b16 %v2046
        %v2086 = vunpack.c.l.b16 %v2047
        %v2087 = vunpack.c.l.b16 %v2048
        %v2088 = vunpack.c.l.b16 %v2049
        %v2089 = vunpack.c.l.b16 %v2050
        %v2090 = vunpack.c.l.b16 %v2051
        %v2091 = vunpack.c.l.b16 %v2052
        %v2092 = vpack.c.b16 %v2077, %v2076
        %v2093 = vpack.c.b16 %v2079, %v2078
        %v2094 = vpack.c.b16 %v2081, %v2080
        %v2095 = vpack.c.b16 %v2083, %v2082
        %v2096 = vpack.c.b16 %v2085, %v2084
        %v2097 = vpack.c.b16 %v2087, %v2086
        %v2098 = vpack.c.b16 %v2089, %v2088
        %v2099 = vpack.c.b16 %v2091, %v2090
        %2108 = vmatprep.subr.bf16.mxu0 0
        %2109 = vmatpush1.bf16.msra.mxu0 %v2092
        %2110 = vmatprep.subr.bf16.mxu0 0
        %2111 = vmatpush1.bf16.msra.mxu0 %v2093
        %2112 = vmatprep.subr.bf16.mxu0 0
        %2113 = vmatpush1.bf16.msra.mxu0 %v2094
        %2114 = vmatprep.subr.bf16.mxu0 0
        %2115 = vmatpush1.bf16.msra.mxu0 %v2095
        %2116 = vmatprep.subr.bf16.mxu0 0
        %2117 = vmatpush1.bf16.msra.mxu0 %v2096
        %2118 = vmatprep.subr.bf16.mxu0 0
        %2119 = vmatpush1.bf16.msra.mxu0 %v2097
        %2120 = vmatprep.subr.bf16.mxu0 0
        %2121 = vmatpush1.bf16.msra.mxu0 %v2098
        %2122 = vmatprep.subr.bf16.mxu0 0
        %2123 = vmatpush1.bf16.msra.mxu0 %v2099
        %2124 = vmatprep.subr.bf16.mxu0 0
        %2125 = vmatpush1.bf16.msra.mxu0 0
        %2126 = vmatprep.subr.bf16.mxu0 0
        %2127 = vmatpush1.bf16.msra.mxu0 0
        %2128 = vmatprep.subr.bf16.mxu0 0
        %2129 = vmatpush1.bf16.msra.mxu0 0
        %2130 = vmatprep.subr.bf16.mxu0 0
        %2131 = vmatpush1.bf16.msra.mxu0 0
        %2132 = vmatprep.subr.bf16.mxu0 0
        %2133 = vmatpush1.bf16.msra.mxu0 0
        %2134 = vmatprep.subr.bf16.mxu0 0
        %2135 = vmatpush1.bf16.msra.mxu0 0
        %2136 = vmatprep.subr.bf16.mxu0 0
        %2137 = vmatpush1.bf16.msra.mxu0 0
        %2138 = vmatprep.subr.bf16.mxu0 0
        %2139 = vmatpush1.bf16.msra.mxu0 0
        %2140 = vmatprep.mubr.bf16.mxu0 0
        %2141 = vmatmul.mubr.bf16.gmra.mrb[0].mxu0 %v2035
        %v2142 = vpop.f32.mrb[0].mxu0
        %v2143 = vadd.f32 %v2058, %v2142
        %v2144 = vpop.f32.mrb[0].mxu0
        %v2145 = vpop.f32.mrb[0].mxu0
        %v2146 = vadd.f32 %v2058, %v2145
        %v2147 = vpop.f32.mrb[0].mxu0
        %2148 = vmatprep.mubr.bf16.mxu0 0
        %2149 = vmatmul.mubr.bf16.gmra.mrb[0].mxu0 %v2036
        %v2150 = vpop.f32.mrb[0].mxu0
        %v2151 = vadd.f32 %v2058, %v2150
        %v2152 = vpop.f32.mrb[0].mxu0
        %v2153 = vpop.f32.mrb[0].mxu0
        %v2154 = vadd.f32 %v2058, %v2153
        %v2155 = vpop.f32.mrb[0].mxu0
        %2156 = vdwg.mxu0
        %v2157 = vadd.f32 %v1845, %v2143
        %v2158 = vadd.f32 %v1846, %v2146
        %v2159 = vadd.f32 %v1847, %v2151
        %v2160 = vadd.f32 %v1848, %v2154
        %2161 = vst.msk [vmem:[#allocation2] sm:$0xff] %vm1097, %v2157
        %2162 = vst.msk [vmem:[#allocation2 + $0x8] sm:$0xff] %vm1097, %v2158
        %2163 = vst.msk [vmem:[#allocation2 + $0x10] sm:$0xff] %vm1097, %v2159
        %2164 = vst.msk [vmem:[#allocation2 + $0x18] sm:$0xff] %vm1097, %v2160
        %p2165 = scmp.eq.s32.totalorder %s35, 1
        // Predicated region
        $region177: #{text_encoder_forward.1} parent=95 // pred_check
          %p2166 = pneg %p2165
        $region178: #{text_encoder_forward.1} parent=95 // pred_check_branch
          %2168 = sbr.rel (%p2166) target = $region180
        $region179: #{text_encoder_forward.1} parent=95 // pred_region
          %v2169 = vlaneseq
          %v2170 = vand.u32 %v2169, 127
          %v2171 = vlaneseq
          %v2172 = vshrl.u32 %v2171, 7
          %v2173 = vmul.u32 %v2172, 8
          %v2174 = vld [vmem:[#allocation6] sm:$0xf]
          %v2175 = vadd.s32 %v2174, %v2173
          %2176 = vset.pattern.permute.xlu0 0
          %2177 = vperm.xlu0 %2176, %v2175
          %v2178 = vpop.permute.xlu0 %2177
          %vm2179 = vcmp.eq.s32.totalorder %v2170, %v2178
          %v2180 = vsel %vm2179, 1, 0
          %v2181 = vcvt.s32.f32 %v2180
          %v2182 = vpack.c.bf16 %v2181, %v2181
          %v2183 = vpack.c.bf16 %v2158, %v2157
          %v2184 = vpack.c.bf16 %v2160, %v2159
          %v2186 = vsel %vm1097, %v2182, 0
          %2188 = vmatprep.subr.bf16.mxu0 0
          %2189 = vmatpush1.bf16.msra.mxu0 %v2183
          %2190 = vmatprep.subr.bf16.mxu0 0
          %2191 = vmatpush1.bf16.msra.mxu0 %v2184
          %2192 = vmatprep.subr.bf16.mxu0 0
          %2193 = vmatpush1.bf16.msra.mxu0 0
          %2194 = vmatprep.subr.bf16.mxu0 0
          %2195 = vmatpush1.bf16.msra.mxu0 0
          %2196 = vmatprep.subr.bf16.mxu0 0
          %2197 = vmatpush1.bf16.msra.mxu0 0
          %2198 = vmatprep.subr.bf16.mxu0 0
          %2199 = vmatpush1.bf16.msra.mxu0 0
          %2200 = vmatprep.subr.bf16.mxu0 0
          %2201 = vmatpush1.bf16.msra.mxu0 0
          %2202 = vmatprep.subr.bf16.mxu0 0
          %2203 = vmatpush1.bf16.msra.mxu0 0
          %2204 = vmatprep.subr.bf16.mxu0 0
          %2205 = vmatpush1.bf16.msra.mxu0 0
          %2206 = vmatprep.subr.bf16.mxu0 0
          %2207 = vmatpush1.bf16.msra.mxu0 0
          %2208 = vmatprep.subr.bf16.mxu0 0
          %2209 = vmatpush1.bf16.msra.mxu0 0
          %2210 = vmatprep.subr.bf16.mxu0 0
          %2211 = vmatpush1.bf16.msra.mxu0 0
          %2212 = vmatprep.subr.bf16.mxu0 0
          %2213 = vmatpush1.bf16.msra.mxu0 0
          %2214 = vmatprep.subr.bf16.mxu0 0
          %2215 = vmatpush1.bf16.msra.mxu0 0
          %2216 = vmatprep.subr.bf16.mxu0 0
          %2217 = vmatpush1.bf16.msra.mxu0 0
          %2218 = vmatprep.subr.bf16.mxu0 0
          %2219 = vmatpush1.bf16.msra.mxu0 0
          %2220 = vmatprep.mubr.bf16.mxu0 0
          %2221 = vmatmul.mubr.bf16.gmra.mrb[0].mxu0 %v2186
          %v2222 = vpop.f32.mrb[0].mxu0
          %v2223 = vadd.f32 0.0, %v2222
          %v2224 = vpop.f32.mrb[0].mxu0
          %v2225 = vpop.f32.mrb[0].mxu0
          %v2226 = vpop.f32.mrb[0].mxu0
          %2227 = vdwg.mxu0
          %v2228 = vld [vmem:[#allocation23] sm:$0x1]
          %v2229 = vld [vmem:[#allocation24] sm:$0x1]
          %vm2230 = vcmask 257024
          %v2231 = vsel %vm2230, %v2223, 0.0
          %2232 = vadd.xlane.f32.xlu0 %v2231
          %v2233 = vpop.xlane.xlu0 %2232
          %v2234 = vmul.f32 %v2233, %v1110
          %v2235 = vsub.f32 %v2223, %v2234
          %v2236 = vmul.f32 %v2235, %v2235
          %v2237 = vsel %vm2230, %v2236, 0.0
          %2238 = vadd.xlane.f32.xlu0 %v2237
          %v2239 = vpop.xlane.xlu0 %2238
          %v2240 = vmul.f32 %v2239, %v1110
          %v2241 = vadd.f32 %v2240, 1e-05
          %v2242 = vrsqrt.pop %v2241
          %v2243 = vmul.f32 %v2235, %v2242
          %v2245 = vlaneseq
          %v2246 = vshrl.u32 %v2245, 7
          %v2247 = vsub.s32 0, %v2246
          %v2248 = vrot.slane %v2228, %v2247
          %v2250 = vmul.f32 %v2243, %v2248
          %v2252 = vlaneseq
          %v2253 = vshrl.u32 %v2252, 7
          %v2254 = vsub.s32 0, %v2253
          %v2255 = vrot.slane %v2229, %v2254
          %v2257 = vadd.f32 %v2250, %v2255
          %v2258 = vpack.c.bf16 %v2257, %v2257
          %v2259 = vld [vmem:[#allocation25] sm:$0xf]
          %v2260 = vld [vmem:[#allocation25 + $0x4] sm:$0xf]
          %v2261 = vld [vmem:[#allocation25 + $0x8] sm:$0xf]
          %v2262 = vld [vmem:[#allocation25 + $0xc] sm:$0xf]
          %v2267 = vunpack.c.l.b16 %v2259
          %v2268 = vunpack.c.l.b16 %v2260
          %v2269 = vunpack.c.l.b16 %v2261
          %v2270 = vunpack.c.l.b16 %v2262
          %v2271 = vpack.c.b16 %v2268, %v2267
          %v2272 = vpack.c.b16 %v2270, %v2269
          %v2276 = vsel %vm1097, %v2258, 0
          %2278 = vmatprep.subr.bf16.mxu0 0
          %2279 = vmatpush1.bf16.msra.mxu0 %v2271
          %2280 = vmatprep.subr.bf16.mxu0 0
          %2281 = vmatpush1.bf16.msra.mxu0 %v2272
          %2282 = vmatprep.subr.bf16.mxu0 0
          %2283 = vmatpush1.bf16.msra.mxu0 0
          %2284 = vmatprep.subr.bf16.mxu0 0
          %2285 = vmatpush1.bf16.msra.mxu0 0
          %2286 = vmatprep.subr.bf16.mxu0 0
          %2287 = vmatpush1.bf16.msra.mxu0 0
          %2288 = vmatprep.subr.bf16.mxu0 0
          %2289 = vmatpush1.bf16.msra.mxu0 0
          %2290 = vmatprep.subr.bf16.mxu0 0
          %2291 = vmatpush1.bf16.msra.mxu0 0
          %2292 = vmatprep.subr.bf16.mxu0 0
          %2293 = vmatpush1.bf16.msra.mxu0 0
          %2294 = vmatprep.subr.bf16.mxu0 0
          %2295 = vmatpush1.bf16.msra.mxu0 0
          %2296 = vmatprep.subr.bf16.mxu0 0
          %2297 = vmatpush1.bf16.msra.mxu0 0
          %2298 = vmatprep.subr.bf16.mxu0 0
          %2299 = vmatpush1.bf16.msra.mxu0 0
          %2300 = vmatprep.subr.bf16.mxu0 0
          %2301 = vmatpush1.bf16.msra.mxu0 0
          %2302 = vmatprep.subr.bf16.mxu0 0
          %2303 = vmatpush1.bf16.msra.mxu0 0
          %2304 = vmatprep.subr.bf16.mxu0 0
          %2305 = vmatpush1.bf16.msra.mxu0 0
          %2306 = vmatprep.subr.bf16.mxu0 0
          %2307 = vmatpush1.bf16.msra.mxu0 0
          %2308 = vmatprep.subr.bf16.mxu0 0
          %2309 = vmatpush1.bf16.msra.mxu0 0
          %2310 = vmatprep.mubr.bf16.mxu0 0
          %2311 = vmatmul.mubr.bf16.gmra.mrb[0].mxu0 %v2276
          %v2312 = vpop.f32.mrb[0].mxu0
          %v2313 = vadd.f32 0.0, %v2312
          %v2314 = vpop.f32.mrb[0].mxu0
          %v2315 = vpop.f32.mrb[0].mxu0
          %v2316 = vpop.f32.mrb[0].mxu0
          %2317 = vdwg.mxu0
          %2318 = vst.msk [vmem:[#allocation27] sm:$0xf] %vm2230, %v2313
        $region180: #{text_encoder_forward.1} parent=95 // pred_fallthru
          _
        // Predicated region
        $region181: #{text_encoder_forward.1} parent=95 // pred_check
          %p2319 = pneg %p507
        $region182: #{text_encoder_forward.1} parent=95 // pred_check_branch
          %2321 = sbr.rel (%p2319) target = $region184
        $region183: #{text_encoder_forward.1} parent=95 // pred_region
          %s2323 = ssub.s32 64, 64
          %2324 = vsyncadd [#allocation5], %s2323
          %s2326 = sshll.u32 [#allocation27], 4
          %s2327 = int_to_ptr.vmem [resolvable:$true] %s2326
          %2329 = dma.vmem_to_hbm [thread:$0]  %s2327, 64, %s19, [#allocation5]
        $region184: #{text_encoder_forward.1} parent=95 // pred_fallthru
          _
        // Predicated region
        $region185: #{text_encoder_forward.1} parent=95 // pred_check
          %p2330 = pneg %p507
        $region186: #{text_encoder_forward.1} parent=95 // pred_check_branch
          %2332 = sbr.rel (%p2330) target = $region188
        $region187: #{text_encoder_forward.1} parent=95 // pred_region
          %2333 = dma.done [#allocation5], 64
        $region188: #{text_encoder_forward.1} parent=95 // pred_fallthru
          _
      $region96: #{text_encoder_forward.1} parent=5 // pred_fallthru
        _
      %p2334 = scmp.le.s32.totalorder 2, %s30
      // Predicated region
      $region189: #{text_encoder_forward.1} parent=5 // pred_check
        %p2335 = pneg %p2334
      $region190: #{text_encoder_forward.1} parent=5 // pred_check_branch
        %2337 = sbr.rel (%p2335) target = $region192
      $region191: #{text_encoder_forward.1} parent=5 // pred_region
        %s2338 = ssub.s32 %s30, 2
      $region192: #{text_encoder_forward.1} parent=5 // pred_fallthru
        _
    $region6: #{text_encoder_forward.1} parent=1 // loop_footer
      %s34 = sadd.s32 1, %s30
    $region7: #{text_encoder_forward.1} parent=1 // loop_footer_branch
      %29 = sbr.rel target = $region3
    $region8: #{text_encoder_forward.1} parent=1 // loop_exit
      _
    %2339 = vsyncpa [#allocation4], 1
    %s2340 = scalar_lea.sflag [#allocation4], 1
    %2341 = vsyncpa %s2340, 1
    %2342 = vsyncpa [#allocation7], 1
    %2343 = vsyncpa [#allocation10], 1
    %2344 = vsyncpa [#allocation26], 1
    %2345 = vsyncpa [#allocation5], 1
    %s2346 = scalar_lea.sflag [#allocation5], 1
    %2347 = vsyncpa %s2346, 1

</llo_original>
